<compile_context>
chip_gen: v6e
topology: v6e:2x2x1
jax: 0.10.0
libtpu: 0.0.40
codegen_flags: <defaults>
</compile_context>

<pallas_src>
import jax
import jax.numpy as jnp
from jax import lax
from jax.experimental import pallas as pl
from jax.experimental.pallas import tpu as pltpu


def _round_up(x, m):
    return (x + m - 1) // m * m


def _full_block(shape):
    n = len(shape)
    return pl.BlockSpec(shape, lambda: (0,) * n)


# ------------------------------ Fused kernel ----------------------------------

def _make_fused_lstm_kernel(T, Bp, H, num_layers):
    """Builds a kernel: [x, (wih,whh,bias)*L, fc_w, fc_b] -> out, with 2 scratches."""

    def kernel(*refs):
        x_ref = refs[0]
        layer_refs = refs[1:1 + 3 * num_layers]
        fcw_ref = refs[1 + 3 * num_layers]
        fcb_ref = refs[2 + 3 * num_layers]
        out_ref = refs[3 + 3 * num_layers]
        gates_sc = refs[4 + 3 * num_layers]   # (T*Bp, 4H) f32
        seq_sc = refs[5 + 3 * num_layers]     # (T*Bp, H)  f32

        for l in range(num_layers):
            wih_ref, whh_ref, b_ref = layer_refs[3 * l:3 * l + 3]

            # Hoisted input projection for the whole sequence: one big MXU matmul.
            # Layer 0 reads the raw input; deeper layers read the previous layer's
            # VMEM-resident output sequence (no HBM round trip between layers).
            layer_in = x_ref[...] if l == 0 else seq_sc[...]
            gates_sc[...] = (
                jnp.dot(layer_in, wih_ref[...], preferred_element_type=jnp.float32)
                + b_ref[...]
            )

            whh = whh_ref[...]  # hoist weight load out of the recurrence

            def step(t, carry):
                h, c = carry
                row = pl.multiple_of(t * Bp, Bp)
                g = gates_sc[pl.ds(row, Bp), :] + jnp.dot(
                    h, whh, preferred_element_type=jnp.float32)
                sig = jax.nn.sigmoid(g)   # full-width EUP push over (Bp, 4H)
                th = jnp.tanh(g)          # full-width EUP push over (Bp, 4H)
                i_g = sig[:, 0 * H:1 * H]
                f_g = sig[:, 1 * H:2 * H]
                o_g = sig[:, 3 * H:4 * H]
                g_g = th[:, 2 * H:3 * H]
                c_new = f_g * c + i_g * g_g
                h_new = o_g * jnp.tanh(c_new)
                seq_sc[pl.ds(row, Bp), :] = h_new
                return h_new, c_new

            h0 = jnp.zeros((Bp, H), jnp.float32)
            c0 = jnp.zeros((Bp, H), jnp.float32)
            lax.fori_loop(0, T, step, (h0, c0), unroll=True)

        # ReLU + FC head over the whole sequence: one matmul + one lane-dense store.
        acts = jnp.maximum(seq_sc[...], 0.0)
        out_ref[...] = (
            jnp.dot(acts, fcw_ref[...], preferred_element_type=jnp.float32)
            + fcb_ref[...]
        ).astype(out_ref.dtype)

    return kernel


# --------------------------------- Full model ---------------------------------

def lstm_forward(x_btd, params):
    """Equivalent of LSTM.forward: x (B, T, in_dim) -> (B, T, id_dim)."""
    B, T, Din = x_btd.shape
    H = params["lstm"][0]["w_hh"].shape[1]
    Dout = params["fc_w"].shape[0]
    num_layers = len(params["lstm"])

    Bp = _round_up(B, 8)          # pad batch to a sublane multiple
    Doutp = _round_up(Dout, 128)  # pad FC output to a lane multiple (unmasked store)

    x = jnp.asarray(x_btd, jnp.float32)
    x = jnp.pad(x, ((0, Bp - B), (0, 0), (0, 0)))
    # time-major, flattened: row index = t * Bp + b
    x_tb = jnp.transpose(x, (1, 0, 2)).reshape(T * Bp, Din)

    inputs = [x_tb]
    in_specs = [_full_block(x_tb.shape)]
    for layer in params["lstm"]:
        wih_t = jnp.asarray(layer["w_ih"], jnp.float32).T      # (Din_l, 4H)
        whh_t = jnp.asarray(layer["w_hh"], jnp.float32).T      # (H, 4H)
        bias = (jnp.asarray(layer["b_ih"], jnp.float32)
                + jnp.asarray(layer["b_hh"], jnp.float32))[None, :]  # (1, 4H)
        inputs += [wih_t, whh_t, bias]
        in_specs += [_full_block(wih_t.shape), _full_block(whh_t.shape),
                     _full_block(bias.shape)]

    fcw = jnp.zeros((H, Doutp), jnp.float32).at[:, :Dout].set(
        jnp.asarray(params["fc_w"], jnp.float32).T)
    fcb = jnp.zeros((1, Doutp), jnp.float32).at[:, :Dout].set(
        jnp.asarray(params["fc_b"], jnp.float32)[None, :])
    inputs += [fcw, fcb]
    in_specs += [_full_block(fcw.shape), _full_block(fcb.shape)]

    kernel = _make_fused_lstm_kernel(T, Bp, H, num_layers)
    out = pl.pallas_call(
        kernel,
        out_shape=jax.ShapeDtypeStruct((T * Bp, Doutp), jnp.float32),
        in_specs=in_specs,
        out_specs=_full_block((T * Bp, Doutp)),
        scratch_shapes=[
            pltpu.VMEM((T * Bp, 4 * H), jnp.float32),   # hoisted gate pre-activations
            pltpu.VMEM((T * Bp, H), jnp.float32),       # inter-layer activation sequence
        ],
    )(*inputs)

    out = out.reshape(T, Bp, Doutp)[:, :B, :Dout]
    return jnp.transpose(out, (1, 0, 2))                 # back to (B, T, id_dim)


# ------------------------------ Pure-JAX reference -----------------------------

def _ref_forward(x_btd, params):
    B, T, _ = x_btd.shape
    h_seq = x_btd.astype(jnp.float32)
    for layer in params["lstm"]:
        w_ih, w_hh = layer["w_ih"], layer["w_hh"]
        b = layer["b_ih"] + layer["b_hh"]
        H = w_hh.shape[1]
        h = jnp.zeros((B, H), jnp.float32)
        c = jnp.zeros((B, H), jnp.float32)
        outs = []
        for t in range(T):
            g = h_seq[:, t, :] @ w_ih.T + h @ w_hh.T + b
            i = jax.nn.sigmoid(g[:, 0 * H:1 * H])
            f = jax.nn.sigmoid(g[:, 1 * H:2 * H])
            gg = jnp.tanh(g[:, 2 * H:3 * H])
            o = jax.nn.sigmoid(g[:, 3 * H:4 * H])
            c = f * c + i * gg
            h = o * jnp.tanh(c)
            outs.append(h)
        h_seq = jnp.stack(outs, axis=1)
    out = jnp.maximum(h_seq, 0.0) @ params["fc_w"].T + params["fc_b"]
    return out


# ----------------------------------- Main --------------------------------------

def _make_params(key, in_dim, hidden_dim, out_dim, layer_num):
    layers = []
    d = in_dim
    for _ in range(layer_num):
        key, k1, k2 = jax.random.split(key, 3)
        layers.append({
            "w_ih": jax.random.normal(k1, (4 * hidden_dim, d), jnp.float32) * 0.2,
            "w_hh": jax.random.normal(k2, (4 * hidden_dim, hidden_dim), jnp.float32) * 0.2,
            "b_ih": jnp.zeros((4 * hidden_dim,), jnp.float32),
            "b_hh": jnp.zeros((4 * hidden_dim,), jnp.float32),
        })
        d = hidden_dim
    key, k3 = jax.random.split(key)
    params = {
        "lstm": layers,
        "fc_w": jax.random.normal(k3, (out_dim, hidden_dim), jnp.float32) * 0.2,
        "fc_b": jnp.zeros((out_dim,), jnp.float32),
    }
    return params


if __name__ == "__main__":
    # Shapes implied by the module: in_dim=2 (action pairs), hidden_dim, id_dim classes.
    B, T, IN_DIM, HIDDEN, ID_DIM, LAYERS = 2, 8, 2, 32, 4, 2

    key = jax.random.PRNGKey(0)
    key, kx = jax.random.split(key)
    x = jax.random.normal(kx, (B, T, IN_DIM), jnp.float32)
    params = _make_params(key, IN_DIM, HIDDEN, ID_DIM, LAYERS)

    fwd = jax.jit(lstm_forward)   # lets XLA fold the tiny pad/transpose plumbing
    out = jax.block_until_ready(fwd(x, params))
    ref = _ref_forward(x, params)

    assert out.shape == (B, T, ID_DIM), out.shape
    assert jnp.allclose(out, ref, atol=1e-4, rtol=1e-4), float(jnp.max(jnp.abs(out - ref)))

    print("KERNEL_OK")
</pallas_src>

<mosaic_0001>
module attributes {stable_mosaic.version = 11 : i64} {
  func.func @kernel(%arg0: memref<64x2xf32, #tpu.memory_space<vmem>>, %arg1: memref<2x128xf32, #tpu.memory_space<vmem>>, %arg2: memref<32x128xf32, #tpu.memory_space<vmem>>, %arg3: memref<1x128xf32, #tpu.memory_space<vmem>>, %arg4: memref<32x128xf32, #tpu.memory_space<vmem>>, %arg5: memref<32x128xf32, #tpu.memory_space<vmem>>, %arg6: memref<1x128xf32, #tpu.memory_space<vmem>>, %arg7: memref<32x128xf32, #tpu.memory_space<vmem>>, %arg8: memref<1x128xf32, #tpu.memory_space<vmem>>, %arg9: memref<64x128xf32, #tpu.memory_space<vmem>>, %arg10: memref<64x128xf32, #tpu.memory_space<vmem>>, %arg11: memref<64x32xf32, #tpu.memory_space<vmem>>) attributes {dimension_semantics = [], scalar_prefetch = 0 : i64, scratch_operands = 2 : i64, tpu.core_type = #tpu.core_type<tc>} {
    %c0 = arith.constant 0 : index
    %c0_0 = arith.constant 0 : index
    %0 = vector.load %arg0[%c0, %c0_0] : memref<64x2xf32, #tpu.memory_space<vmem>>, vector<64x2xf32>
    %c0_1 = arith.constant 0 : index
    %c0_2 = arith.constant 0 : index
    %1 = vector.load %arg1[%c0_1, %c0_2] : memref<2x128xf32, #tpu.memory_space<vmem>>, vector<2x128xf32>
    %cst = arith.constant dense<0.000000e+00> : vector<64x128xf32>
    %2 = tpu.matmul %0, %1, %cst {dimension_numbers = #tpu.dot_dimension_numbers<[1], [0], [0], [1], [0, 0, 1, 1], [], []>} : vector<64x2xf32>, vector<2x128xf32>, vector<64x128xf32> -> vector<64x128xf32>
    %c0_3 = arith.constant 0 : index
    %c0_4 = arith.constant 0 : index
    %3 = vector.load %arg3[%c0_3, %c0_4] : memref<1x128xf32, #tpu.memory_space<vmem>>, vector<1x128xf32>
    %4 = vector.broadcast %3 : vector<1x128xf32> to vector<64x128xf32>
    %5 = arith.addf %2, %4 : vector<64x128xf32>
    %c0_5 = arith.constant 0 : index
    %c0_6 = arith.constant 0 : index
    %6 = vector.load %arg10[%c0_5, %c0_6] : memref<64x128xf32, #tpu.memory_space<vmem>>, vector<64x128xf32>
    tpu.vector_store %arg10[%c0_5, %c0_6], %5 {strides = array<i32>} : memref<64x128xf32, #tpu.memory_space<vmem>>, vector<64x128xf32>,
    %c0_7 = arith.constant 0 : index
    %c0_8 = arith.constant 0 : index
    %7 = vector.load %arg2[%c0_7, %c0_8] : memref<32x128xf32, #tpu.memory_space<vmem>>, vector<32x128xf32>
    %cst_9 = arith.constant 0.000000e+00 : f32
    %8 = vector.broadcast %cst_9 : f32 to vector<8x32xf32>
    %cst_10 = arith.constant 0.000000e+00 : f32
    %9 = vector.broadcast %cst_10 : f32 to vector<8x32xf32>
    %c0_i32 = arith.constant 0 : i32
    %c8_i32 = arith.constant 8 : i32
    %10 = arith.muli %c0_i32, %c8_i32 : i32
    %11 = tpu.assume_multiple %10, 8 : i32
    %12 = arith.index_cast %11 : i32 to index
    %c0_11 = arith.constant 0 : index
    %13 = vector.load %arg10[%12, %c0_11] : memref<64x128xf32, #tpu.memory_space<vmem>>, vector<8x128xf32>
    %cst_12 = arith.constant dense<0.000000e+00> : vector<8x128xf32>
    %14 = tpu.matmul %8, %7, %cst_12 {dimension_numbers = #tpu.dot_dimension_numbers<[1], [0], [0], [1], [0, 0, 1, 1], [], []>} : vector<8x32xf32>, vector<32x128xf32>, vector<8x128xf32> -> vector<8x128xf32>
    %15 = arith.addf %13, %14 : vector<8x128xf32>
    %16 = arith.negf %15 : vector<8x128xf32>
    %17 = math.exp %16 : vector<8x128xf32>
    %cst_13 = arith.constant 1.000000e+00 : f32
    %18 = vector.broadcast %cst_13 : f32 to vector<8x128xf32>
    %19 = arith.addf %18, %17 : vector<8x128xf32>
    %20 = arith.divf %18, %19 : vector<8x128xf32>
    %21 = math.tanh %15 : vector<8x128xf32>
    %22 = vector.extract_strided_slice %20 {offsets = [0, 0], sizes = [8, 32], strides = [1, 1]} : vector<8x128xf32> to vector<8x32xf32>
    %23 = vector.extract_strided_slice %20 {offsets = [0, 32], sizes = [8, 32], strides = [1, 1]} : vector<8x128xf32> to vector<8x32xf32>
    %24 = vector.extract_strided_slice %20 {offsets = [0, 96], sizes = [8, 32], strides = [1, 1]} : vector<8x128xf32> to vector<8x32xf32>
    %25 = vector.extract_strided_slice %21 {offsets = [0, 64], sizes = [8, 32], strides = [1, 1]} : vector<8x128xf32> to vector<8x32xf32>
    %26 = arith.mulf %23, %9 : vector<8x32xf32>
    %27 = arith.mulf %22, %25 : vector<8x32xf32>
    %28 = arith.addf %26, %27 : vector<8x32xf32>
    %29 = math.tanh %28 : vector<8x32xf32>
    %30 = arith.mulf %24, %29 : vector<8x32xf32>
    %31 = arith.index_cast %11 : i32 to index
    %c0_14 = arith.constant 0 : index
    %32 = vector.load %arg11[%31, %c0_14] : memref<64x32xf32, #tpu.memory_space<vmem>>, vector<8x32xf32>
    tpu.vector_store %arg11[%31, %c0_14], %30 {strides = array<i32>} : memref<64x32xf32, #tpu.memory_space<vmem>>, vector<8x32xf32>,
    %c1_i32 = arith.constant 1 : i32
    %c8_i32_15 = arith.constant 8 : i32
    %33 = arith.muli %c1_i32, %c8_i32_15 : i32
    %34 = tpu.assume_multiple %33, 8 : i32
    %35 = arith.index_cast %34 : i32 to index
    %c0_16 = arith.constant 0 : index
    %36 = vector.load %arg10[%35, %c0_16] : memref<64x128xf32, #tpu.memory_space<vmem>>, vector<8x128xf32>
    %cst_17 = arith.constant dense<0.000000e+00> : vector<8x128xf32>
    %37 = tpu.matmul %30, %7, %cst_17 {dimension_numbers = #tpu.dot_dimension_numbers<[1], [0], [0], [1], [0, 0, 1, 1], [], []>} : vector<8x32xf32>, vector<32x128xf32>, vector<8x128xf32> -> vector<8x128xf32>
    %38 = arith.addf %36, %37 : vector<8x128xf32>
    %39 = arith.negf %38 : vector<8x128xf32>
    %40 = math.exp %39 : vector<8x128xf32>
    %cst_18 = arith.constant 1.000000e+00 : f32
    %41 = vector.broadcast %cst_18 : f32 to vector<8x128xf32>
    %42 = arith.addf %41, %40 : vector<8x128xf32>
    %43 = arith.divf %41, %42 : vector<8x128xf32>
    %44 = math.tanh %38 : vector<8x128xf32>
    %45 = vector.extract_strided_slice %43 {offsets = [0, 0], sizes = [8, 32], strides = [1, 1]} : vector<8x128xf32> to vector<8x32xf32>
    %46 = vector.extract_strided_slice %43 {offsets = [0, 32], sizes = [8, 32], strides = [1, 1]} : vector<8x128xf32> to vector<8x32xf32>
    %47 = vector.extract_strided_slice %43 {offsets = [0, 96], sizes = [8, 32], strides = [1, 1]} : vector<8x128xf32> to vector<8x32xf32>
    %48 = vector.extract_strided_slice %44 {offsets = [0, 64], sizes = [8, 32], strides = [1, 1]} : vector<8x128xf32> to vector<8x32xf32>
    %49 = arith.mulf %46, %28 : vector<8x32xf32>
    %50 = arith.mulf %45, %48 : vector<8x32xf32>
    %51 = arith.addf %49, %50 : vector<8x32xf32>
    %52 = math.tanh %51 : vector<8x32xf32>
    %53 = arith.mulf %47, %52 : vector<8x32xf32>
    %54 = arith.index_cast %34 : i32 to index
    %c0_19 = arith.constant 0 : index
    %55 = vector.load %arg11[%54, %c0_19] : memref<64x32xf32, #tpu.memory_space<vmem>>, vector<8x32xf32>
    tpu.vector_store %arg11[%54, %c0_19], %53 {strides = array<i32>} : memref<64x32xf32, #tpu.memory_space<vmem>>, vector<8x32xf32>,
    %c2_i32 = arith.constant 2 : i32
    %c8_i32_20 = arith.constant 8 : i32
    %56 = arith.muli %c2_i32, %c8_i32_20 : i32
    %57 = tpu.assume_multiple %56, 8 : i32
    %58 = arith.index_cast %57 : i32 to index
    %c0_21 = arith.constant 0 : index
    %59 = vector.load %arg10[%58, %c0_21] : memref<64x128xf32, #tpu.memory_space<vmem>>, vector<8x128xf32>
    %cst_22 = arith.constant dense<0.000000e+00> : vector<8x128xf32>
    %60 = tpu.matmul %53, %7, %cst_22 {dimension_numbers = #tpu.dot_dimension_numbers<[1], [0], [0], [1], [0, 0, 1, 1], [], []>} : vector<8x32xf32>, vector<32x128xf32>, vector<8x128xf32> -> vector<8x128xf32>
    %61 = arith.addf %59, %60 : vector<8x128xf32>
    %62 = arith.negf %61 : vector<8x128xf32>
    %63 = math.exp %62 : vector<8x128xf32>
    %cst_23 = arith.constant 1.000000e+00 : f32
    %64 = vector.broadcast %cst_23 : f32 to vector<8x128xf32>
    %65 = arith.addf %64, %63 : vector<8x128xf32>
    %66 = arith.divf %64, %65 : vector<8x128xf32>
    %67 = math.tanh %61 : vector<8x128xf32>
    %68 = vector.extract_strided_slice %66 {offsets = [0, 0], sizes = [8, 32], strides = [1, 1]} : vector<8x128xf32> to vector<8x32xf32>
    %69 = vector.extract_strided_slice %66 {offsets = [0, 32], sizes = [8, 32], strides = [1, 1]} : vector<8x128xf32> to vector<8x32xf32>
    %70 = vector.extract_strided_slice %66 {offsets = [0, 96], sizes = [8, 32], strides = [1, 1]} : vector<8x128xf32> to vector<8x32xf32>
    %71 = vector.extract_strided_slice %67 {offsets = [0, 64], sizes = [8, 32], strides = [1, 1]} : vector<8x128xf32> to vector<8x32xf32>
    %72 = arith.mulf %69, %51 : vector<8x32xf32>
    %73 = arith.mulf %68, %71 : vector<8x32xf32>
    %74 = arith.addf %72, %73 : vector<8x32xf32>
    %75 = math.tanh %74 : vector<8x32xf32>
    %76 = arith.mulf %70, %75 : vector<8x32xf32>
    %77 = arith.index_cast %57 : i32 to index
    %c0_24 = arith.constant 0 : index
    %78 = vector.load %arg11[%77, %c0_24] : memref<64x32xf32, #tpu.memory_space<vmem>>, vector<8x32xf32>
    tpu.vector_store %arg11[%77, %c0_24], %76 {strides = array<i32>} : memref<64x32xf32, #tpu.memory_space<vmem>>, vector<8x32xf32>,
    %c3_i32 = arith.constant 3 : i32
    %c8_i32_25 = arith.constant 8 : i32
    %79 = arith.muli %c3_i32, %c8_i32_25 : i32
    %80 = tpu.assume_multiple %79, 8 : i32
    %81 = arith.index_cast %80 : i32 to index
    %c0_26 = arith.constant 0 : index
    %82 = vector.load %arg10[%81, %c0_26] : memref<64x128xf32, #tpu.memory_space<vmem>>, vector<8x128xf32>
    %cst_27 = arith.constant dense<0.000000e+00> : vector<8x128xf32>
    %83 = tpu.matmul %76, %7, %cst_27 {dimension_numbers = #tpu.dot_dimension_numbers<[1], [0], [0], [1], [0, 0, 1, 1], [], []>} : vector<8x32xf32>, vector<32x128xf32>, vector<8x128xf32> -> vector<8x128xf32>
    %84 = arith.addf %82, %83 : vector<8x128xf32>
    %85 = arith.negf %84 : vector<8x128xf32>
    %86 = math.exp %85 : vector<8x128xf32>
    %cst_28 = arith.constant 1.000000e+00 : f32
    %87 = vector.broadcast %cst_28 : f32 to vector<8x128xf32>
    %88 = arith.addf %87, %86 : vector<8x128xf32>
    %89 = arith.divf %87, %88 : vector<8x128xf32>
    %90 = math.tanh %84 : vector<8x128xf32>
    %91 = vector.extract_strided_slice %89 {offsets = [0, 0], sizes = [8, 32], strides = [1, 1]} : vector<8x128xf32> to vector<8x32xf32>
    %92 = vector.extract_strided_slice %89 {offsets = [0, 32], sizes = [8, 32], strides = [1, 1]} : vector<8x128xf32> to vector<8x32xf32>
    %93 = vector.extract_strided_slice %89 {offsets = [0, 96], sizes = [8, 32], strides = [1, 1]} : vector<8x128xf32> to vector<8x32xf32>
    %94 = vector.extract_strided_slice %90 {offsets = [0, 64], sizes = [8, 32], strides = [1, 1]} : vector<8x128xf32> to vector<8x32xf32>
    %95 = arith.mulf %92, %74 : vector<8x32xf32>
    %96 = arith.mulf %91, %94 : vector<8x32xf32>
    %97 = arith.addf %95, %96 : vector<8x32xf32>
    %98 = math.tanh %97 : vector<8x32xf32>
    %99 = arith.mulf %93, %98 : vector<8x32xf32>
    %100 = arith.index_cast %80 : i32 to index
    %c0_29 = arith.constant 0 : index
    %101 = vector.load %arg11[%100, %c0_29] : memref<64x32xf32, #tpu.memory_space<vmem>>, vector<8x32xf32>
    tpu.vector_store %arg11[%100, %c0_29], %99 {strides = array<i32>} : memref<64x32xf32, #tpu.memory_space<vmem>>, vector<8x32xf32>,
    %c4_i32 = arith.constant 4 : i32
    %c8_i32_30 = arith.constant 8 : i32
    %102 = arith.muli %c4_i32, %c8_i32_30 : i32
    %103 = tpu.assume_multiple %102, 8 : i32
    %104 = arith.index_cast %103 : i32 to index
    %c0_31 = arith.constant 0 : index
    %105 = vector.load %arg10[%104, %c0_31] : memref<64x128xf32, #tpu.memory_space<vmem>>, vector<8x128xf32>
    %cst_32 = arith.constant dense<0.000000e+00> : vector<8x128xf32>
    %106 = tpu.matmul %99, %7, %cst_32 {dimension_numbers = #tpu.dot_dimension_numbers<[1], [0], [0], [1], [0, 0, 1, 1], [], []>} : vector<8x32xf32>, vector<32x128xf32>, vector<8x128xf32> -> vector<8x128xf32>
    %107 = arith.addf %105, %106 : vector<8x128xf32>
    %108 = arith.negf %107 : vector<8x128xf32>
    %109 = math.exp %108 : vector<8x128xf32>
    %cst_33 = arith.constant 1.000000e+00 : f32
    %110 = vector.broadcast %cst_33 : f32 to vector<8x128xf32>
    %111 = arith.addf %110, %109 : vector<8x128xf32>
    %112 = arith.divf %110, %111 : vector<8x128xf32>
    %113 = math.tanh %107 : vector<8x128xf32>
    %114 = vector.extract_strided_slice %112 {offsets = [0, 0], sizes = [8, 32], strides = [1, 1]} : vector<8x128xf32> to vector<8x32xf32>
    %115 = vector.extract_strided_slice %112 {offsets = [0, 32], sizes = [8, 32], strides = [1, 1]} : vector<8x128xf32> to vector<8x32xf32>
    %116 = vector.extract_strided_slice %112 {offsets = [0, 96], sizes = [8, 32], strides = [1, 1]} : vector<8x128xf32> to vector<8x32xf32>
    %117 = vector.extract_strided_slice %113 {offsets = [0, 64], sizes = [8, 32], strides = [1, 1]} : vector<8x128xf32> to vector<8x32xf32>
    %118 = arith.mulf %115, %97 : vector<8x32xf32>
    %119 = arith.mulf %114, %117 : vector<8x32xf32>
    %120 = arith.addf %118, %119 : vector<8x32xf32>
    %121 = math.tanh %120 : vector<8x32xf32>
    %122 = arith.mulf %116, %121 : vector<8x32xf32>
    %123 = arith.index_cast %103 : i32 to index
    %c0_34 = arith.constant 0 : index
    %124 = vector.load %arg11[%123, %c0_34] : memref<64x32xf32, #tpu.memory_space<vmem>>, vector<8x32xf32>
    tpu.vector_store %arg11[%123, %c0_34], %122 {strides = array<i32>} : memref<64x32xf32, #tpu.memory_space<vmem>>, vector<8x32xf32>,
    %c5_i32 = arith.constant 5 : i32
    %c8_i32_35 = arith.constant 8 : i32
    %125 = arith.muli %c5_i32, %c8_i32_35 : i32
    %126 = tpu.assume_multiple %125, 8 : i32
    %127 = arith.index_cast %126 : i32 to index
    %c0_36 = arith.constant 0 : index
    %128 = vector.load %arg10[%127, %c0_36] : memref<64x128xf32, #tpu.memory_space<vmem>>, vector<8x128xf32>
    %cst_37 = arith.constant dense<0.000000e+00> : vector<8x128xf32>
    %129 = tpu.matmul %122, %7, %cst_37 {dimension_numbers = #tpu.dot_dimension_numbers<[1], [0], [0], [1], [0, 0, 1, 1], [], []>} : vector<8x32xf32>, vector<32x128xf32>, vector<8x128xf32> -> vector<8x128xf32>
    %130 = arith.addf %128, %129 : vector<8x128xf32>
    %131 = arith.negf %130 : vector<8x128xf32>
    %132 = math.exp %131 : vector<8x128xf32>
    %cst_38 = arith.constant 1.000000e+00 : f32
    %133 = vector.broadcast %cst_38 : f32 to vector<8x128xf32>
    %134 = arith.addf %133, %132 : vector<8x128xf32>
    %135 = arith.divf %133, %134 : vector<8x128xf32>
    %136 = math.tanh %130 : vector<8x128xf32>
    %137 = vector.extract_strided_slice %135 {offsets = [0, 0], sizes = [8, 32], strides = [1, 1]} : vector<8x128xf32> to vector<8x32xf32>
    %138 = vector.extract_strided_slice %135 {offsets = [0, 32], sizes = [8, 32], strides = [1, 1]} : vector<8x128xf32> to vector<8x32xf32>
    %139 = vector.extract_strided_slice %135 {offsets = [0, 96], sizes = [8, 32], strides = [1, 1]} : vector<8x128xf32> to vector<8x32xf32>
    %140 = vector.extract_strided_slice %136 {offsets = [0, 64], sizes = [8, 32], strides = [1, 1]} : vector<8x128xf32> to vector<8x32xf32>
    %141 = arith.mulf %138, %120 : vector<8x32xf32>
    %142 = arith.mulf %137, %140 : vector<8x32xf32>
    %143 = arith.addf %141, %142 : vector<8x32xf32>
    %144 = math.tanh %143 : vector<8x32xf32>
    %145 = arith.mulf %139, %144 : vector<8x32xf32>
    %146 = arith.index_cast %126 : i32 to index
    %c0_39 = arith.constant 0 : index
    %147 = vector.load %arg11[%146, %c0_39] : memref<64x32xf32, #tpu.memory_space<vmem>>, vector<8x32xf32>
    tpu.vector_store %arg11[%146, %c0_39], %145 {strides = array<i32>} : memref<64x32xf32, #tpu.memory_space<vmem>>, vector<8x32xf32>,
    %c6_i32 = arith.constant 6 : i32
    %c8_i32_40 = arith.constant 8 : i32
    %148 = arith.muli %c6_i32, %c8_i32_40 : i32
    %149 = tpu.assume_multiple %148, 8 : i32
    %150 = arith.index_cast %149 : i32 to index
    %c0_41 = arith.constant 0 : index
    %151 = vector.load %arg10[%150, %c0_41] : memref<64x128xf32, #tpu.memory_space<vmem>>, vector<8x128xf32>
    %cst_42 = arith.constant dense<0.000000e+00> : vector<8x128xf32>
    %152 = tpu.matmul %145, %7, %cst_42 {dimension_numbers = #tpu.dot_dimension_numbers<[1], [0], [0], [1], [0, 0, 1, 1], [], []>} : vector<8x32xf32>, vector<32x128xf32>, vector<8x128xf32> -> vector<8x128xf32>
    %153 = arith.addf %151, %152 : vector<8x128xf32>
    %154 = arith.negf %153 : vector<8x128xf32>
    %155 = math.exp %154 : vector<8x128xf32>
    %cst_43 = arith.constant 1.000000e+00 : f32
    %156 = vector.broadcast %cst_43 : f32 to vector<8x128xf32>
    %157 = arith.addf %156, %155 : vector<8x128xf32>
    %158 = arith.divf %156, %157 : vector<8x128xf32>
    %159 = math.tanh %153 : vector<8x128xf32>
    %160 = vector.extract_strided_slice %158 {offsets = [0, 0], sizes = [8, 32], strides = [1, 1]} : vector<8x128xf32> to vector<8x32xf32>
    %161 = vector.extract_strided_slice %158 {offsets = [0, 32], sizes = [8, 32], strides = [1, 1]} : vector<8x128xf32> to vector<8x32xf32>
    %162 = vector.extract_strided_slice %158 {offsets = [0, 96], sizes = [8, 32], strides = [1, 1]} : vector<8x128xf32> to vector<8x32xf32>
    %163 = vector.extract_strided_slice %159 {offsets = [0, 64], sizes = [8, 32], strides = [1, 1]} : vector<8x128xf32> to vector<8x32xf32>
    %164 = arith.mulf %161, %143 : vector<8x32xf32>
    %165 = arith.mulf %160, %163 : vector<8x32xf32>
    %166 = arith.addf %164, %165 : vector<8x32xf32>
    %167 = math.tanh %166 : vector<8x32xf32>
    %168 = arith.mulf %162, %167 : vector<8x32xf32>
    %169 = arith.index_cast %149 : i32 to index
    %c0_44 = arith.constant 0 : index
    %170 = vector.load %arg11[%169, %c0_44] : memref<64x32xf32, #tpu.memory_space<vmem>>, vector<8x32xf32>
    tpu.vector_store %arg11[%169, %c0_44], %168 {strides = array<i32>} : memref<64x32xf32, #tpu.memory_space<vmem>>, vector<8x32xf32>,
    %c7_i32 = arith.constant 7 : i32
    %c8_i32_45 = arith.constant 8 : i32
    %171 = arith.muli %c7_i32, %c8_i32_45 : i32
    %172 = tpu.assume_multiple %171, 8 : i32
    %173 = arith.index_cast %172 : i32 to index
    %c0_46 = arith.constant 0 : index
    %174 = vector.load %arg10[%173, %c0_46] : memref<64x128xf32, #tpu.memory_space<vmem>>, vector<8x128xf32>
    %cst_47 = arith.constant dense<0.000000e+00> : vector<8x128xf32>
    %175 = tpu.matmul %168, %7, %cst_47 {dimension_numbers = #tpu.dot_dimension_numbers<[1], [0], [0], [1], [0, 0, 1, 1], [], []>} : vector<8x32xf32>, vector<32x128xf32>, vector<8x128xf32> -> vector<8x128xf32>
    %176 = arith.addf %174, %175 : vector<8x128xf32>
    %177 = arith.negf %176 : vector<8x128xf32>
    %178 = math.exp %177 : vector<8x128xf32>
    %cst_48 = arith.constant 1.000000e+00 : f32
    %179 = vector.broadcast %cst_48 : f32 to vector<8x128xf32>
    %180 = arith.addf %179, %178 : vector<8x128xf32>
    %181 = arith.divf %179, %180 : vector<8x128xf32>
    %182 = math.tanh %176 : vector<8x128xf32>
    %183 = vector.extract_strided_slice %181 {offsets = [0, 0], sizes = [8, 32], strides = [1, 1]} : vector<8x128xf32> to vector<8x32xf32>
    %184 = vector.extract_strided_slice %181 {offsets = [0, 32], sizes = [8, 32], strides = [1, 1]} : vector<8x128xf32> to vector<8x32xf32>
    %185 = vector.extract_strided_slice %181 {offsets = [0, 96], sizes = [8, 32], strides = [1, 1]} : vector<8x128xf32> to vector<8x32xf32>
    %186 = vector.extract_strided_slice %182 {offsets = [0, 64], sizes = [8, 32], strides = [1, 1]} : vector<8x128xf32> to vector<8x32xf32>
    %187 = arith.mulf %184, %166 : vector<8x32xf32>
    %188 = arith.mulf %183, %186 : vector<8x32xf32>
    %189 = arith.addf %187, %188 : vector<8x32xf32>
    %190 = math.tanh %189 : vector<8x32xf32>
    %191 = arith.mulf %185, %190 : vector<8x32xf32>
    %192 = arith.index_cast %172 : i32 to index
    %c0_49 = arith.constant 0 : index
    %193 = vector.load %arg11[%192, %c0_49] : memref<64x32xf32, #tpu.memory_space<vmem>>, vector<8x32xf32>
    tpu.vector_store %arg11[%192, %c0_49], %191 {strides = array<i32>} : memref<64x32xf32, #tpu.memory_space<vmem>>, vector<8x32xf32>,
    %c8_i32_50 = arith.constant 8 : i32
    %c0_51 = arith.constant 0 : index
    %c0_52 = arith.constant 0 : index
    %194 = vector.load %arg11[%c0_51, %c0_52] : memref<64x32xf32, #tpu.memory_space<vmem>>, vector<64x32xf32>
    %c0_53 = arith.constant 0 : index
    %c0_54 = arith.constant 0 : index
    %195 = vector.load %arg4[%c0_53, %c0_54] : memref<32x128xf32, #tpu.memory_space<vmem>>, vector<32x128xf32>
    %cst_55 = arith.constant dense<0.000000e+00> : vector<64x128xf32>
    %196 = tpu.matmul %194, %195, %cst_55 {dimension_numbers = #tpu.dot_dimension_numbers<[1], [0], [0], [1], [0, 0, 1, 1], [], []>} : vector<64x32xf32>, vector<32x128xf32>, vector<64x128xf32> -> vector<64x128xf32>
    %c0_56 = arith.constant 0 : index
    %c0_57 = arith.constant 0 : index
    %197 = vector.load %arg6[%c0_56, %c0_57] : memref<1x128xf32, #tpu.memory_space<vmem>>, vector<1x128xf32>
    %198 = vector.broadcast %197 : vector<1x128xf32> to vector<64x128xf32>
    %199 = arith.addf %196, %198 : vector<64x128xf32>
    %c0_58 = arith.constant 0 : index
    %c0_59 = arith.constant 0 : index
    %200 = vector.load %arg10[%c0_58, %c0_59] : memref<64x128xf32, #tpu.memory_space<vmem>>, vector<64x128xf32>
    tpu.vector_store %arg10[%c0_58, %c0_59], %199 {strides = array<i32>} : memref<64x128xf32, #tpu.memory_space<vmem>>, vector<64x128xf32>,
    %c0_60 = arith.constant 0 : index
    %c0_61 = arith.constant 0 : index
    %201 = vector.load %arg5[%c0_60, %c0_61] : memref<32x128xf32, #tpu.memory_space<vmem>>, vector<32x128xf32>
    %cst_62 = arith.constant 0.000000e+00 : f32
    %202 = vector.broadcast %cst_62 : f32 to vector<8x32xf32>
    %cst_63 = arith.constant 0.000000e+00 : f32
    %203 = vector.broadcast %cst_63 : f32 to vector<8x32xf32>
    %c0_i32_64 = arith.constant 0 : i32
    %c8_i32_65 = arith.constant 8 : i32
    %204 = arith.muli %c0_i32_64, %c8_i32_65 : i32
    %205 = tpu.assume_multiple %204, 8 : i32
    %206 = arith.index_cast %205 : i32 to index
    %c0_66 = arith.constant 0 : index
    %207 = vector.load %arg10[%206, %c0_66] : memref<64x128xf32, #tpu.memory_space<vmem>>, vector<8x128xf32>
    %cst_67 = arith.constant dense<0.000000e+00> : vector<8x128xf32>
    %208 = tpu.matmul %202, %201, %cst_67 {dimension_numbers = #tpu.dot_dimension_numbers<[1], [0], [0], [1], [0, 0, 1, 1], [], []>} : vector<8x32xf32>, vector<32x128xf32>, vector<8x128xf32> -> vector<8x128xf32>
    %209 = arith.addf %207, %208 : vector<8x128xf32>
    %210 = arith.negf %209 : vector<8x128xf32>
    %211 = math.exp %210 : vector<8x128xf32>
    %cst_68 = arith.constant 1.000000e+00 : f32
    %212 = vector.broadcast %cst_68 : f32 to vector<8x128xf32>
    %213 = arith.addf %212, %211 : vector<8x128xf32>
    %214 = arith.divf %212, %213 : vector<8x128xf32>
    %215 = math.tanh %209 : vector<8x128xf32>
    %216 = vector.extract_strided_slice %214 {offsets = [0, 0], sizes = [8, 32], strides = [1, 1]} : vector<8x128xf32> to vector<8x32xf32>
    %217 = vector.extract_strided_slice %214 {offsets = [0, 32], sizes = [8, 32], strides = [1, 1]} : vector<8x128xf32> to vector<8x32xf32>
    %218 = vector.extract_strided_slice %214 {offsets = [0, 96], sizes = [8, 32], strides = [1, 1]} : vector<8x128xf32> to vector<8x32xf32>
    %219 = vector.extract_strided_slice %215 {offsets = [0, 64], sizes = [8, 32], strides = [1, 1]} : vector<8x128xf32> to vector<8x32xf32>
    %220 = arith.mulf %217, %203 : vector<8x32xf32>
    %221 = arith.mulf %216, %219 : vector<8x32xf32>
    %222 = arith.addf %220, %221 : vector<8x32xf32>
    %223 = math.tanh %222 : vector<8x32xf32>
    %224 = arith.mulf %218, %223 : vector<8x32xf32>
    %225 = arith.index_cast %205 : i32 to index
    %c0_69 = arith.constant 0 : index
    %226 = vector.load %arg11[%225, %c0_69] : memref<64x32xf32, #tpu.memory_space<vmem>>, vector<8x32xf32>
    tpu.vector_store %arg11[%225, %c0_69], %224 {strides = array<i32>} : memref<64x32xf32, #tpu.memory_space<vmem>>, vector<8x32xf32>,
    %c1_i32_70 = arith.constant 1 : i32
    %c8_i32_71 = arith.constant 8 : i32
    %227 = arith.muli %c1_i32_70, %c8_i32_71 : i32
    %228 = tpu.assume_multiple %227, 8 : i32
    %229 = arith.index_cast %228 : i32 to index
    %c0_72 = arith.constant 0 : index
    %230 = vector.load %arg10[%229, %c0_72] : memref<64x128xf32, #tpu.memory_space<vmem>>, vector<8x128xf32>
    %cst_73 = arith.constant dense<0.000000e+00> : vector<8x128xf32>
    %231 = tpu.matmul %224, %201, %cst_73 {dimension_numbers = #tpu.dot_dimension_numbers<[1], [0], [0], [1], [0, 0, 1, 1], [], []>} : vector<8x32xf32>, vector<32x128xf32>, vector<8x128xf32> -> vector<8x128xf32>
    %232 = arith.addf %230, %231 : vector<8x128xf32>
    %233 = arith.negf %232 : vector<8x128xf32>
    %234 = math.exp %233 : vector<8x128xf32>
    %cst_74 = arith.constant 1.000000e+00 : f32
    %235 = vector.broadcast %cst_74 : f32 to vector<8x128xf32>
    %236 = arith.addf %235, %234 : vector<8x128xf32>
    %237 = arith.divf %235, %236 : vector<8x128xf32>
    %238 = math.tanh %232 : vector<8x128xf32>
    %239 = vector.extract_strided_slice %237 {offsets = [0, 0], sizes = [8, 32], strides = [1, 1]} : vector<8x128xf32> to vector<8x32xf32>
    %240 = vector.extract_strided_slice %237 {offsets = [0, 32], sizes = [8, 32], strides = [1, 1]} : vector<8x128xf32> to vector<8x32xf32>
    %241 = vector.extract_strided_slice %237 {offsets = [0, 96], sizes = [8, 32], strides = [1, 1]} : vector<8x128xf32> to vector<8x32xf32>
    %242 = vector.extract_strided_slice %238 {offsets = [0, 64], sizes = [8, 32], strides = [1, 1]} : vector<8x128xf32> to vector<8x32xf32>
    %243 = arith.mulf %240, %222 : vector<8x32xf32>
    %244 = arith.mulf %239, %242 : vector<8x32xf32>
    %245 = arith.addf %243, %244 : vector<8x32xf32>
    %246 = math.tanh %245 : vector<8x32xf32>
    %247 = arith.mulf %241, %246 : vector<8x32xf32>
    %248 = arith.index_cast %228 : i32 to index
    %c0_75 = arith.constant 0 : index
    %249 = vector.load %arg11[%248, %c0_75] : memref<64x32xf32, #tpu.memory_space<vmem>>, vector<8x32xf32>
    tpu.vector_store %arg11[%248, %c0_75], %247 {strides = array<i32>} : memref<64x32xf32, #tpu.memory_space<vmem>>, vector<8x32xf32>,
    %c2_i32_76 = arith.constant 2 : i32
    %c8_i32_77 = arith.constant 8 : i32
    %250 = arith.muli %c2_i32_76, %c8_i32_77 : i32
    %251 = tpu.assume_multiple %250, 8 : i32
    %252 = arith.index_cast %251 : i32 to index
    %c0_78 = arith.constant 0 : index
    %253 = vector.load %arg10[%252, %c0_78] : memref<64x128xf32, #tpu.memory_space<vmem>>, vector<8x128xf32>
    %cst_79 = arith.constant dense<0.000000e+00> : vector<8x128xf32>
    %254 = tpu.matmul %247, %201, %cst_79 {dimension_numbers = #tpu.dot_dimension_numbers<[1], [0], [0], [1], [0, 0, 1, 1], [], []>} : vector<8x32xf32>, vector<32x128xf32>, vector<8x128xf32> -> vector<8x128xf32>
    %255 = arith.addf %253, %254 : vector<8x128xf32>
    %256 = arith.negf %255 : vector<8x128xf32>
    %257 = math.exp %256 : vector<8x128xf32>
    %cst_80 = arith.constant 1.000000e+00 : f32
    %258 = vector.broadcast %cst_80 : f32 to vector<8x128xf32>
    %259 = arith.addf %258, %257 : vector<8x128xf32>
    %260 = arith.divf %258, %259 : vector<8x128xf32>
    %261 = math.tanh %255 : vector<8x128xf32>
    %262 = vector.extract_strided_slice %260 {offsets = [0, 0], sizes = [8, 32], strides = [1, 1]} : vector<8x128xf32> to vector<8x32xf32>
    %263 = vector.extract_strided_slice %260 {offsets = [0, 32], sizes = [8, 32], strides = [1, 1]} : vector<8x128xf32> to vector<8x32xf32>
    %264 = vector.extract_strided_slice %260 {offsets = [0, 96], sizes = [8, 32], strides = [1, 1]} : vector<8x128xf32> to vector<8x32xf32>
    %265 = vector.extract_strided_slice %261 {offsets = [0, 64], sizes = [8, 32], strides = [1, 1]} : vector<8x128xf32> to vector<8x32xf32>
    %266 = arith.mulf %263, %245 : vector<8x32xf32>
    %267 = arith.mulf %262, %265 : vector<8x32xf32>
    %268 = arith.addf %266, %267 : vector<8x32xf32>
    %269 = math.tanh %268 : vector<8x32xf32>
    %270 = arith.mulf %264, %269 : vector<8x32xf32>
    %271 = arith.index_cast %251 : i32 to index
    %c0_81 = arith.constant 0 : index
    %272 = vector.load %arg11[%271, %c0_81] : memref<64x32xf32, #tpu.memory_space<vmem>>, vector<8x32xf32>
    tpu.vector_store %arg11[%271, %c0_81], %270 {strides = array<i32>} : memref<64x32xf32, #tpu.memory_space<vmem>>, vector<8x32xf32>,
    %c3_i32_82 = arith.constant 3 : i32
    %c8_i32_83 = arith.constant 8 : i32
    %273 = arith.muli %c3_i32_82, %c8_i32_83 : i32
    %274 = tpu.assume_multiple %273, 8 : i32
    %275 = arith.index_cast %274 : i32 to index
    %c0_84 = arith.constant 0 : index
    %276 = vector.load %arg10[%275, %c0_84] : memref<64x128xf32, #tpu.memory_space<vmem>>, vector<8x128xf32>
    %cst_85 = arith.constant dense<0.000000e+00> : vector<8x128xf32>
    %277 = tpu.matmul %270, %201, %cst_85 {dimension_numbers = #tpu.dot_dimension_numbers<[1], [0], [0], [1], [0, 0, 1, 1], [], []>} : vector<8x32xf32>, vector<32x128xf32>, vector<8x128xf32> -> vector<8x128xf32>
    %278 = arith.addf %276, %277 : vector<8x128xf32>
    %279 = arith.negf %278 : vector<8x128xf32>
    %280 = math.exp %279 : vector<8x128xf32>
    %cst_86 = arith.constant 1.000000e+00 : f32
    %281 = vector.broadcast %cst_86 : f32 to vector<8x128xf32>
    %282 = arith.addf %281, %280 : vector<8x128xf32>
    %283 = arith.divf %281, %282 : vector<8x128xf32>
    %284 = math.tanh %278 : vector<8x128xf32>
    %285 = vector.extract_strided_slice %283 {offsets = [0, 0], sizes = [8, 32], strides = [1, 1]} : vector<8x128xf32> to vector<8x32xf32>
    %286 = vector.extract_strided_slice %283 {offsets = [0, 32], sizes = [8, 32], strides = [1, 1]} : vector<8x128xf32> to vector<8x32xf32>
    %287 = vector.extract_strided_slice %283 {offsets = [0, 96], sizes = [8, 32], strides = [1, 1]} : vector<8x128xf32> to vector<8x32xf32>
    %288 = vector.extract_strided_slice %284 {offsets = [0, 64], sizes = [8, 32], strides = [1, 1]} : vector<8x128xf32> to vector<8x32xf32>
    %289 = arith.mulf %286, %268 : vector<8x32xf32>
    %290 = arith.mulf %285, %288 : vector<8x32xf32>
    %291 = arith.addf %289, %290 : vector<8x32xf32>
    %292 = math.tanh %291 : vector<8x32xf32>
    %293 = arith.mulf %287, %292 : vector<8x32xf32>
    %294 = arith.index_cast %274 : i32 to index
    %c0_87 = arith.constant 0 : index
    %295 = vector.load %arg11[%294, %c0_87] : memref<64x32xf32, #tpu.memory_space<vmem>>, vector<8x32xf32>
    tpu.vector_store %arg11[%294, %c0_87], %293 {strides = array<i32>} : memref<64x32xf32, #tpu.memory_space<vmem>>, vector<8x32xf32>,
    %c4_i32_88 = arith.constant 4 : i32
    %c8_i32_89 = arith.constant 8 : i32
    %296 = arith.muli %c4_i32_88, %c8_i32_89 : i32
    %297 = tpu.assume_multiple %296, 8 : i32
    %298 = arith.index_cast %297 : i32 to index
    %c0_90 = arith.constant 0 : index
    %299 = vector.load %arg10[%298, %c0_90] : memref<64x128xf32, #tpu.memory_space<vmem>>, vector<8x128xf32>
    %cst_91 = arith.constant dense<0.000000e+00> : vector<8x128xf32>
    %300 = tpu.matmul %293, %201, %cst_91 {dimension_numbers = #tpu.dot_dimension_numbers<[1], [0], [0], [1], [0, 0, 1, 1], [], []>} : vector<8x32xf32>, vector<32x128xf32>, vector<8x128xf32> -> vector<8x128xf32>
    %301 = arith.addf %299, %300 : vector<8x128xf32>
    %302 = arith.negf %301 : vector<8x128xf32>
    %303 = math.exp %302 : vector<8x128xf32>
    %cst_92 = arith.constant 1.000000e+00 : f32
    %304 = vector.broadcast %cst_92 : f32 to vector<8x128xf32>
    %305 = arith.addf %304, %303 : vector<8x128xf32>
    %306 = arith.divf %304, %305 : vector<8x128xf32>
    %307 = math.tanh %301 : vector<8x128xf32>
    %308 = vector.extract_strided_slice %306 {offsets = [0, 0], sizes = [8, 32], strides = [1, 1]} : vector<8x128xf32> to vector<8x32xf32>
    %309 = vector.extract_strided_slice %306 {offsets = [0, 32], sizes = [8, 32], strides = [1, 1]} : vector<8x128xf32> to vector<8x32xf32>
    %310 = vector.extract_strided_slice %306 {offsets = [0, 96], sizes = [8, 32], strides = [1, 1]} : vector<8x128xf32> to vector<8x32xf32>
    %311 = vector.extract_strided_slice %307 {offsets = [0, 64], sizes = [8, 32], strides = [1, 1]} : vector<8x128xf32> to vector<8x32xf32>
    %312 = arith.mulf %309, %291 : vector<8x32xf32>
    %313 = arith.mulf %308, %311 : vector<8x32xf32>
    %314 = arith.addf %312, %313 : vector<8x32xf32>
    %315 = math.tanh %314 : vector<8x32xf32>
    %316 = arith.mulf %310, %315 : vector<8x32xf32>
    %317 = arith.index_cast %297 : i32 to index
    %c0_93 = arith.constant 0 : index
    %318 = vector.load %arg11[%317, %c0_93] : memref<64x32xf32, #tpu.memory_space<vmem>>, vector<8x32xf32>
    tpu.vector_store %arg11[%317, %c0_93], %316 {strides = array<i32>} : memref<64x32xf32, #tpu.memory_space<vmem>>, vector<8x32xf32>,
    %c5_i32_94 = arith.constant 5 : i32
    %c8_i32_95 = arith.constant 8 : i32
    %319 = arith.muli %c5_i32_94, %c8_i32_95 : i32
    %320 = tpu.assume_multiple %319, 8 : i32
    %321 = arith.index_cast %320 : i32 to index
    %c0_96 = arith.constant 0 : index
    %322 = vector.load %arg10[%321, %c0_96] : memref<64x128xf32, #tpu.memory_space<vmem>>, vector<8x128xf32>
    %cst_97 = arith.constant dense<0.000000e+00> : vector<8x128xf32>
    %323 = tpu.matmul %316, %201, %cst_97 {dimension_numbers = #tpu.dot_dimension_numbers<[1], [0], [0], [1], [0, 0, 1, 1], [], []>} : vector<8x32xf32>, vector<32x128xf32>, vector<8x128xf32> -> vector<8x128xf32>
    %324 = arith.addf %322, %323 : vector<8x128xf32>
    %325 = arith.negf %324 : vector<8x128xf32>
    %326 = math.exp %325 : vector<8x128xf32>
    %cst_98 = arith.constant 1.000000e+00 : f32
    %327 = vector.broadcast %cst_98 : f32 to vector<8x128xf32>
    %328 = arith.addf %327, %326 : vector<8x128xf32>
    %329 = arith.divf %327, %328 : vector<8x128xf32>
    %330 = math.tanh %324 : vector<8x128xf32>
    %331 = vector.extract_strided_slice %329 {offsets = [0, 0], sizes = [8, 32], strides = [1, 1]} : vector<8x128xf32> to vector<8x32xf32>
    %332 = vector.extract_strided_slice %329 {offsets = [0, 32], sizes = [8, 32], strides = [1, 1]} : vector<8x128xf32> to vector<8x32xf32>
    %333 = vector.extract_strided_slice %329 {offsets = [0, 96], sizes = [8, 32], strides = [1, 1]} : vector<8x128xf32> to vector<8x32xf32>
    %334 = vector.extract_strided_slice %330 {offsets = [0, 64], sizes = [8, 32], strides = [1, 1]} : vector<8x128xf32> to vector<8x32xf32>
    %335 = arith.mulf %332, %314 : vector<8x32xf32>
    %336 = arith.mulf %331, %334 : vector<8x32xf32>
    %337 = arith.addf %335, %336 : vector<8x32xf32>
    %338 = math.tanh %337 : vector<8x32xf32>
    %339 = arith.mulf %333, %338 : vector<8x32xf32>
    %340 = arith.index_cast %320 : i32 to index
    %c0_99 = arith.constant 0 : index
    %341 = vector.load %arg11[%340, %c0_99] : memref<64x32xf32, #tpu.memory_space<vmem>>, vector<8x32xf32>
    tpu.vector_store %arg11[%340, %c0_99], %339 {strides = array<i32>} : memref<64x32xf32, #tpu.memory_space<vmem>>, vector<8x32xf32>,
    %c6_i32_100 = arith.constant 6 : i32
    %c8_i32_101 = arith.constant 8 : i32
    %342 = arith.muli %c6_i32_100, %c8_i32_101 : i32
    %343 = tpu.assume_multiple %342, 8 : i32
    %344 = arith.index_cast %343 : i32 to index
    %c0_102 = arith.constant 0 : index
    %345 = vector.load %arg10[%344, %c0_102] : memref<64x128xf32, #tpu.memory_space<vmem>>, vector<8x128xf32>
    %cst_103 = arith.constant dense<0.000000e+00> : vector<8x128xf32>
    %346 = tpu.matmul %339, %201, %cst_103 {dimension_numbers = #tpu.dot_dimension_numbers<[1], [0], [0], [1], [0, 0, 1, 1], [], []>} : vector<8x32xf32>, vector<32x128xf32>, vector<8x128xf32> -> vector<8x128xf32>
    %347 = arith.addf %345, %346 : vector<8x128xf32>
    %348 = arith.negf %347 : vector<8x128xf32>
    %349 = math.exp %348 : vector<8x128xf32>
    %cst_104 = arith.constant 1.000000e+00 : f32
    %350 = vector.broadcast %cst_104 : f32 to vector<8x128xf32>
    %351 = arith.addf %350, %349 : vector<8x128xf32>
    %352 = arith.divf %350, %351 : vector<8x128xf32>
    %353 = math.tanh %347 : vector<8x128xf32>
    %354 = vector.extract_strided_slice %352 {offsets = [0, 0], sizes = [8, 32], strides = [1, 1]} : vector<8x128xf32> to vector<8x32xf32>
    %355 = vector.extract_strided_slice %352 {offsets = [0, 32], sizes = [8, 32], strides = [1, 1]} : vector<8x128xf32> to vector<8x32xf32>
    %356 = vector.extract_strided_slice %352 {offsets = [0, 96], sizes = [8, 32], strides = [1, 1]} : vector<8x128xf32> to vector<8x32xf32>
    %357 = vector.extract_strided_slice %353 {offsets = [0, 64], sizes = [8, 32], strides = [1, 1]} : vector<8x128xf32> to vector<8x32xf32>
    %358 = arith.mulf %355, %337 : vector<8x32xf32>
    %359 = arith.mulf %354, %357 : vector<8x32xf32>
    %360 = arith.addf %358, %359 : vector<8x32xf32>
    %361 = math.tanh %360 : vector<8x32xf32>
    %362 = arith.mulf %356, %361 : vector<8x32xf32>
    %363 = arith.index_cast %343 : i32 to index
    %c0_105 = arith.constant 0 : index
    %364 = vector.load %arg11[%363, %c0_105] : memref<64x32xf32, #tpu.memory_space<vmem>>, vector<8x32xf32>
    tpu.vector_store %arg11[%363, %c0_105], %362 {strides = array<i32>} : memref<64x32xf32, #tpu.memory_space<vmem>>, vector<8x32xf32>,
    %c7_i32_106 = arith.constant 7 : i32
    %c8_i32_107 = arith.constant 8 : i32
    %365 = arith.muli %c7_i32_106, %c8_i32_107 : i32
    %366 = tpu.assume_multiple %365, 8 : i32
    %367 = arith.index_cast %366 : i32 to index
    %c0_108 = arith.constant 0 : index
    %368 = vector.load %arg10[%367, %c0_108] : memref<64x128xf32, #tpu.memory_space<vmem>>, vector<8x128xf32>
    %cst_109 = arith.constant dense<0.000000e+00> : vector<8x128xf32>
    %369 = tpu.matmul %362, %201, %cst_109 {dimension_numbers = #tpu.dot_dimension_numbers<[1], [0], [0], [1], [0, 0, 1, 1], [], []>} : vector<8x32xf32>, vector<32x128xf32>, vector<8x128xf32> -> vector<8x128xf32>
    %370 = arith.addf %368, %369 : vector<8x128xf32>
    %371 = arith.negf %370 : vector<8x128xf32>
    %372 = math.exp %371 : vector<8x128xf32>
    %cst_110 = arith.constant 1.000000e+00 : f32
    %373 = vector.broadcast %cst_110 : f32 to vector<8x128xf32>
    %374 = arith.addf %373, %372 : vector<8x128xf32>
    %375 = arith.divf %373, %374 : vector<8x128xf32>
    %376 = math.tanh %370 : vector<8x128xf32>
    %377 = vector.extract_strided_slice %375 {offsets = [0, 0], sizes = [8, 32], strides = [1, 1]} : vector<8x128xf32> to vector<8x32xf32>
    %378 = vector.extract_strided_slice %375 {offsets = [0, 32], sizes = [8, 32], strides = [1, 1]} : vector<8x128xf32> to vector<8x32xf32>
    %379 = vector.extract_strided_slice %375 {offsets = [0, 96], sizes = [8, 32], strides = [1, 1]} : vector<8x128xf32> to vector<8x32xf32>
    %380 = vector.extract_strided_slice %376 {offsets = [0, 64], sizes = [8, 32], strides = [1, 1]} : vector<8x128xf32> to vector<8x32xf32>
    %381 = arith.mulf %378, %360 : vector<8x32xf32>
    %382 = arith.mulf %377, %380 : vector<8x32xf32>
    %383 = arith.addf %381, %382 : vector<8x32xf32>
    %384 = math.tanh %383 : vector<8x32xf32>
    %385 = arith.mulf %379, %384 : vector<8x32xf32>
    %386 = arith.index_cast %366 : i32 to index
    %c0_111 = arith.constant 0 : index
    %387 = vector.load %arg11[%386, %c0_111] : memref<64x32xf32, #tpu.memory_space<vmem>>, vector<8x32xf32>
    tpu.vector_store %arg11[%386, %c0_111], %385 {strides = array<i32>} : memref<64x32xf32, #tpu.memory_space<vmem>>, vector<8x32xf32>,
    %c8_i32_112 = arith.constant 8 : i32
    %c0_113 = arith.constant 0 : index
    %c0_114 = arith.constant 0 : index
    %388 = vector.load %arg11[%c0_113, %c0_114] : memref<64x32xf32, #tpu.memory_space<vmem>>, vector<64x32xf32>
    %cst_115 = arith.constant 0.000000e+00 : f32
    %389 = vector.broadcast %cst_115 : f32 to vector<64x32xf32>
    %390 = arith.maximumf %388, %389 : vector<64x32xf32>
    %c0_116 = arith.constant 0 : index
    %c0_117 = arith.constant 0 : index
    %391 = vector.load %arg7[%c0_116, %c0_117] : memref<32x128xf32, #tpu.memory_space<vmem>>, vector<32x128xf32>
    %cst_118 = arith.constant dense<0.000000e+00> : vector<64x128xf32>
    %392 = tpu.matmul %390, %391, %cst_118 {dimension_numbers = #tpu.dot_dimension_numbers<[1], [0], [0], [1], [0, 0, 1, 1], [], []>} : vector<64x32xf32>, vector<32x128xf32>, vector<64x128xf32> -> vector<64x128xf32>
    %c0_119 = arith.constant 0 : index
    %c0_120 = arith.constant 0 : index
    %393 = vector.load %arg8[%c0_119, %c0_120] : memref<1x128xf32, #tpu.memory_space<vmem>>, vector<1x128xf32>
    %394 = vector.broadcast %393 : vector<1x128xf32> to vector<64x128xf32>
    %395 = arith.addf %392, %394 : vector<64x128xf32>
    %c0_121 = arith.constant 0 : index
    %c0_122 = arith.constant 0 : index
    %396 = vector.load %arg9[%c0_121, %c0_122] : memref<64x128xf32, #tpu.memory_space<vmem>>, vector<64x128xf32>
    tpu.vector_store %arg9[%c0_121, %c0_122], %395 {strides = array<i32>} : memref<64x128xf32, #tpu.memory_space<vmem>>, vector<64x128xf32>,
    return
  }
}

</mosaic_0001>

<llo_original>
// kernel: lstm_forward.1
$region0: #{lstm_forward.1}
  #allocation0 [shape = 'u32[]', space=smem, size = 0x4, offset = 0x4, fixed_abs, tag = 'smem constant byte address 0x4 - core index']
  #allocation1 [shape = 'u32[144,128]{1,0:T(1,128)}', space=vmem, size = 0x12000, scoped, tag = 'internal scratch']
  #allocation2 [shape = 'f32[64,128]{1,0:T(8,128)}', space=vmem, size = 0x8000, scoped, tag = 'scratch operand']
  #allocation3 [shape = 'f32[64,32]{1,0:T(8,128)}', space=vmem, size = 0x8000, scoped, tag = 'scratch operand']
  %s0 = inlined_call_operand.vmem [shape: f32[64,2], index: 0, kind: input, shape index: {}]
  %s1 = inlined_call_operand.vmem [shape: f32[2,128], index: 1, kind: input, shape index: {}]
  %s2 = inlined_call_operand.vmem [shape: f32[32,128], index: 2, kind: input, shape index: {}]
  %s3 = inlined_call_operand.vmem [shape: f32[1,128], index: 3, kind: input, shape index: {}]
  %s4 = inlined_call_operand.vmem [shape: f32[32,128], index: 4, kind: input, shape index: {}]
  %s5 = inlined_call_operand.vmem [shape: f32[32,128], index: 5, kind: input, shape index: {}]
  %s6 = inlined_call_operand.vmem [shape: f32[1,128], index: 6, kind: input, shape index: {}]
  %s7 = inlined_call_operand.vmem [shape: f32[32,128], index: 7, kind: input, shape index: {}]
  %s8 = inlined_call_operand.vmem [shape: f32[1,128], index: 8, kind: input, shape index: {}]
  %s9 = inlined_call_operand.vmem [shape: f32[64,128], index: 9, kind: output, shape index: {}]
  %s10 = sld [smem:[#allocation0]]
  $region46: #{lstm_forward.1} parent=0
    _
  %s12 = ssub.s32 1, %s10
  %s13 = scalar_select 0, %s12, %s10
  // Predicated region
  $region2: #{lstm_forward.1} parent=0 // pred_check
    _
  $region3: #{lstm_forward.1} parent=0 // pred_check_branch
    %15 = sbr.rel (0) target = $region5
  $region4: #{lstm_forward.1} parent=0 // pred_region
    _
  $region5: #{lstm_forward.1} parent=0 // pred_fallthru
    _
  // Predicated region
  $region6: #{lstm_forward.1} parent=0 // pred_check
    _
  $region7: #{lstm_forward.1} parent=0 // pred_check_branch
    %17 = sbr.rel (0) target = $region9
  $region8: #{lstm_forward.1} parent=0 // pred_region
    _
  $region9: #{lstm_forward.1} parent=0 // pred_fallthru
    _
  // Predicated region
  $region10: #{lstm_forward.1} parent=0 // pred_check
    _
  $region11: #{lstm_forward.1} parent=0 // pred_check_branch
    %19 = sbr.rel (0) target = $region13
  $region12: #{lstm_forward.1} parent=0 // pred_region
    _
  $region13: #{lstm_forward.1} parent=0 // pred_fallthru
    _
  // Predicated region
  $region14: #{lstm_forward.1} parent=0 // pred_check
    _
  $region15: #{lstm_forward.1} parent=0 // pred_check_branch
    %21 = sbr.rel (0) target = $region17
  $region16: #{lstm_forward.1} parent=0 // pred_region
    _
  $region17: #{lstm_forward.1} parent=0 // pred_fallthru
    _
  // Predicated region
  $region18: #{lstm_forward.1} parent=0 // pred_check
    _
  $region19: #{lstm_forward.1} parent=0 // pred_check_branch
    %23 = sbr.rel (0) target = $region21
  $region20: #{lstm_forward.1} parent=0 // pred_region
    _
  $region21: #{lstm_forward.1} parent=0 // pred_fallthru
    _
  // Predicated region
  $region22: #{lstm_forward.1} parent=0 // pred_check
    _
  $region23: #{lstm_forward.1} parent=0 // pred_check_branch
    %25 = sbr.rel (0) target = $region25
  $region24: #{lstm_forward.1} parent=0 // pred_region
    _
  $region25: #{lstm_forward.1} parent=0 // pred_fallthru
    _
  // Predicated region
  $region26: #{lstm_forward.1} parent=0 // pred_check
    _
  $region27: #{lstm_forward.1} parent=0 // pred_check_branch
    %27 = sbr.rel (0) target = $region29
  $region28: #{lstm_forward.1} parent=0 // pred_region
    _
  $region29: #{lstm_forward.1} parent=0 // pred_fallthru
    _
  // Predicated region
  $region30: #{lstm_forward.1} parent=0 // pred_check
    _
  $region31: #{lstm_forward.1} parent=0 // pred_check_branch
    %29 = sbr.rel (0) target = $region33
  $region32: #{lstm_forward.1} parent=0 // pred_region
    _
  $region33: #{lstm_forward.1} parent=0 // pred_fallthru
    _
  // Predicated region
  $region34: #{lstm_forward.1} parent=0 // pred_check
    _
  $region35: #{lstm_forward.1} parent=0 // pred_check_branch
    %31 = sbr.rel (0) target = $region37
  $region36: #{lstm_forward.1} parent=0 // pred_region
    _
  $region37: #{lstm_forward.1} parent=0 // pred_fallthru
    _
  %v32 = vld [vmem:[%s0] sm:$0xff]
  %v33 = vld [vmem:[%s0 + $0x8] sm:$0xff]
  %v34 = vld [vmem:[%s0 + $0x10] sm:$0xff]
  %v35 = vld [vmem:[%s0 + $0x18] sm:$0xff]
  %v36 = vld [vmem:[%s0 + $0x20] sm:$0xff]
  %v37 = vld [vmem:[%s0 + $0x28] sm:$0xff]
  %v38 = vld [vmem:[%s0 + $0x30] sm:$0xff]
  %v39 = vld [vmem:[%s0 + $0x38] sm:$0xff]
  %v40 = vld [vmem:[%s1] sm:$0x3]
  %v41 = vld [vmem:[%s3] sm:$0x1]
  %v43 = vlaneseq
  %v44 = vshrl.u32 %v43, 7
  %v45 = vsub.s32 0, %v44
  %v46 = vrot.slane %v41, %v45
  %vm48 = vcmask 15360
  %v50 = vsel %vm48, %v32, 0
  %v53 = vsel %vm48, %v33, 0
  %v56 = vsel %vm48, %v34, 0
  %v59 = vsel %vm48, %v35, 0
  %v62 = vsel %vm48, %v36, 0
  %v65 = vsel %vm48, %v37, 0
  %v68 = vsel %vm48, %v38, 0
  %v71 = vsel %vm48, %v39, 0
  %vm73 = vcmask 1041408
  %v75 = vsel %vm73, %v40, 0
  %77 = vmatprep.subr.mxu0 0.0
  %78 = vmatpush1.msra.mxu0 0.0
  %79 = vmatprep.subr.mxu0 0.0
  %80 = vmatpush1.msra.mxu0 0.0
  %81 = vmatprep.subr.mxu0 0.0
  %82 = vmatpush1.msra.mxu0 0.0
  %83 = vmatprep.subr.mxu0 0.0
  %84 = vmatpush1.msra.mxu0 0.0
  %85 = vmatprep.subr.mxu0 0.0
  %86 = vmatpush1.msra.mxu0 0.0
  %87 = vmatprep.subr.mxu0 0.0
  %88 = vmatpush1.msra.mxu0 0.0
  %89 = vmatprep.subr.mxu0 0.0
  %90 = vmatpush1.msra.mxu0 0.0
  %91 = vmatprep.subr.mxu0 0.0
  %92 = vmatpush1.msra.mxu0 0.0
  %93 = vmatprep.subr.mxu0 0.0
  %94 = vmatpush1.msra.mxu0 0.0
  %95 = vmatprep.subr.mxu0 0.0
  %96 = vmatpush1.msra.mxu0 0.0
  %97 = vmatprep.subr.mxu0 0.0
  %98 = vmatpush1.msra.mxu0 0.0
  %99 = vmatprep.subr.mxu0 0.0
  %100 = vmatpush1.msra.mxu0 0.0
  %101 = vmatprep.subr.mxu0 0.0
  %102 = vmatpush1.msra.mxu0 0.0
  %103 = vmatprep.subr.mxu0 0.0
  %104 = vmatpush1.msra.mxu0 0.0
  %105 = vmatprep.subr.mxu0 0.0
  %106 = vmatpush1.msra.mxu0 0.0
  %107 = vmatprep.subr.mxu0 0.0
  %108 = vmatpush1.msra.mxu0 %v75
  %109 = vmatprep.subr.mxu0 0.0
  %110 = vmatpush2.msra.mxu0 0.0
  %111 = vmatprep.subr.mxu0 0.0
  %112 = vmatpush2.msra.mxu0 0.0
  %113 = vmatprep.subr.mxu0 0.0
  %114 = vmatpush2.msra.mxu0 0.0
  %115 = vmatprep.subr.mxu0 0.0
  %116 = vmatpush2.msra.mxu0 0.0
  %117 = vmatprep.subr.mxu0 0.0
  %118 = vmatpush2.msra.mxu0 0.0
  %119 = vmatprep.subr.mxu0 0.0
  %120 = vmatpush2.msra.mxu0 0.0
  %121 = vmatprep.subr.mxu0 0.0
  %122 = vmatpush2.msra.mxu0 0.0
  %123 = vmatprep.subr.mxu0 0.0
  %124 = vmatpush2.msra.mxu0 0.0
  %125 = vmatprep.subr.mxu0 0.0
  %126 = vmatpush2.msra.mxu0 0.0
  %127 = vmatprep.subr.mxu0 0.0
  %128 = vmatpush2.msra.mxu0 0.0
  %129 = vmatprep.subr.mxu0 0.0
  %130 = vmatpush2.msra.mxu0 0.0
  %131 = vmatprep.subr.mxu0 0.0
  %132 = vmatpush2.msra.mxu0 0.0
  %133 = vmatprep.subr.mxu0 0.0
  %134 = vmatpush2.msra.mxu0 0.0
  %135 = vmatprep.subr.mxu0 0.0
  %136 = vmatpush2.msra.mxu0 0.0
  %137 = vmatprep.subr.mxu0 0.0
  %138 = vmatpush2.msra.mxu0 0.0
  %139 = vmatprep.subr.mxu0 0.0
  %140 = vmatpush2.msra.mxu0 0.0
  %141 = vmatprep.mubr.f32.mxu0 0.0
  %142 = vmatmul.mubr.f32.gmra.mxu0 %v50
  %v143 = vpop.f32.mrf.mxu0
  %v144 = vadd.f32 %v46, %v143
  %v145 = vpop.f32.mrf.mxu0
  %146 = vmatprep.mubr.f32.mxu0 0.0
  %147 = vmatmul.mubr.f32.gmra.mxu0 %v53
  %v148 = vpop.f32.mrf.mxu0
  %v149 = vadd.f32 %v46, %v148
  %v150 = vpop.f32.mrf.mxu0
  %151 = vmatprep.mubr.f32.mxu0 0.0
  %152 = vmatmul.mubr.f32.gmra.mxu0 %v56
  %v153 = vpop.f32.mrf.mxu0
  %v154 = vadd.f32 %v46, %v153
  %v155 = vpop.f32.mrf.mxu0
  %156 = vmatprep.mubr.f32.mxu0 0.0
  %157 = vmatmul.mubr.f32.gmra.mxu0 %v59
  %v158 = vpop.f32.mrf.mxu0
  %v159 = vadd.f32 %v46, %v158
  %v160 = vpop.f32.mrf.mxu0
  %161 = vmatprep.mubr.f32.mxu0 0.0
  %162 = vmatmul.mubr.f32.gmra.mxu0 %v62
  %v163 = vpop.f32.mrf.mxu0
  %v164 = vadd.f32 %v46, %v163
  %v165 = vpop.f32.mrf.mxu0
  %166 = vmatprep.mubr.f32.mxu0 0.0
  %167 = vmatmul.mubr.f32.gmra.mxu0 %v65
  %v168 = vpop.f32.mrf.mxu0
  %v169 = vadd.f32 %v46, %v168
  %v170 = vpop.f32.mrf.mxu0
  %171 = vmatprep.mubr.f32.mxu0 0.0
  %172 = vmatmul.mubr.f32.gmra.mxu0 %v68
  %v173 = vpop.f32.mrf.mxu0
  %v174 = vadd.f32 %v46, %v173
  %v175 = vpop.f32.mrf.mxu0
  %176 = vmatprep.mubr.f32.mxu0 0.0
  %177 = vmatmul.mubr.f32.gmra.mxu0 %v71
  %v178 = vpop.f32.mrf.mxu0
  %v179 = vadd.f32 %v46, %v178
  %v180 = vpop.f32.mrf.mxu0
  %181 = vdwg.mxu0
  %182 = vst [vmem:[#allocation2] sm:$0xff] %v144
  %183 = vst [vmem:[#allocation2 + $0x8] sm:$0xff] %v149
  %184 = vst [vmem:[#allocation2 + $0x10] sm:$0xff] %v154
  %185 = vst [vmem:[#allocation2 + $0x18] sm:$0xff] %v159
  %186 = vst [vmem:[#allocation2 + $0x20] sm:$0xff] %v164
  %187 = vst [vmem:[#allocation2 + $0x28] sm:$0xff] %v169
  %188 = vst [vmem:[#allocation2 + $0x30] sm:$0xff] %v174
  %189 = vst [vmem:[#allocation2 + $0x38] sm:$0xff] %v179
  %v190 = vld [vmem:[%s2] sm:$0xff]
  %v191 = vld [vmem:[%s2 + $0x8] sm:$0xff]
  %v192 = vld [vmem:[%s2 + $0x10] sm:$0xff]
  %v193 = vld [vmem:[%s2 + $0x18] sm:$0xff]
  %v194 = vld [vmem:[#allocation2] sm:$0xff]
  %vm195 = vcmask 261120
  %v197 = vsel %vm195, 0.0, 0
  %199 = vmatprep.subr.mxu0 0.0
  %200 = vmatpush1.msra.mxu0 0.0
  %201 = vmatprep.subr.mxu0 0.0
  %202 = vmatpush1.msra.mxu0 0.0
  %203 = vmatprep.subr.mxu0 0.0
  %204 = vmatpush1.msra.mxu0 0.0
  %205 = vmatprep.subr.mxu0 0.0
  %206 = vmatpush1.msra.mxu0 0.0
  %207 = vmatprep.subr.mxu0 0.0
  %208 = vmatpush1.msra.mxu0 0.0
  %209 = vmatprep.subr.mxu0 0.0
  %210 = vmatpush1.msra.mxu0 0.0
  %211 = vmatprep.subr.mxu0 0.0
  %212 = vmatpush1.msra.mxu0 0.0
  %213 = vmatprep.subr.mxu0 0.0
  %214 = vmatpush1.msra.mxu0 0.0
  %215 = vmatprep.subr.mxu0 0.0
  %216 = vmatpush1.msra.mxu0 0.0
  %217 = vmatprep.subr.mxu0 0.0
  %218 = vmatpush1.msra.mxu0 0.0
  %219 = vmatprep.subr.mxu0 0.0
  %220 = vmatpush1.msra.mxu0 0.0
  %221 = vmatprep.subr.mxu0 0.0
  %222 = vmatpush1.msra.mxu0 0.0
  %223 = vmatprep.subr.mxu0 0.0
  %224 = vmatpush1.msra.mxu0 %v193
  %225 = vmatprep.subr.mxu0 0.0
  %226 = vmatpush1.msra.mxu0 %v192
  %227 = vmatprep.subr.mxu0 0.0
  %228 = vmatpush1.msra.mxu0 %v191
  %229 = vmatprep.subr.mxu0 0.0
  %230 = vmatpush1.msra.mxu0 %v190
  %231 = vmatprep.subr.mxu0 0.0
  %232 = vmatpush2.msra.mxu0 0.0
  %233 = vmatprep.subr.mxu0 0.0
  %234 = vmatpush2.msra.mxu0 0.0
  %235 = vmatprep.subr.mxu0 0.0
  %236 = vmatpush2.msra.mxu0 0.0
  %237 = vmatprep.subr.mxu0 0.0
  %238 = vmatpush2.msra.mxu0 0.0
  %239 = vmatprep.subr.mxu0 0.0
  %240 = vmatpush2.msra.mxu0 0.0
  %241 = vmatprep.subr.mxu0 0.0
  %242 = vmatpush2.msra.mxu0 0.0
  %243 = vmatprep.subr.mxu0 0.0
  %244 = vmatpush2.msra.mxu0 0.0
  %245 = vmatprep.subr.mxu0 0.0
  %246 = vmatpush2.msra.mxu0 0.0
  %247 = vmatprep.subr.mxu0 0.0
  %248 = vmatpush2.msra.mxu0 0.0
  %249 = vmatprep.subr.mxu0 0.0
  %250 = vmatpush2.msra.mxu0 0.0
  %251 = vmatprep.subr.mxu0 0.0
  %252 = vmatpush2.msra.mxu0 0.0
  %253 = vmatprep.subr.mxu0 0.0
  %254 = vmatpush2.msra.mxu0 0.0
  %255 = vmatprep.subr.mxu0 0.0
  %256 = vmatpush2.msra.mxu0 0.0
  %257 = vmatprep.subr.mxu0 0.0
  %258 = vmatpush2.msra.mxu0 0.0
  %259 = vmatprep.subr.mxu0 0.0
  %260 = vmatpush2.msra.mxu0 0.0
  %261 = vmatprep.subr.mxu0 0.0
  %262 = vmatpush2.msra.mxu0 0.0
  %263 = vmatprep.mubr.f32.mxu0 0.0
  %264 = vmatmul.mubr.f32.gmra.mxu0 %v197
  %v265 = vpop.f32.mrf.mxu0
  %v266 = vadd.f32 0.0, %v265
  %v267 = vpop.f32.mrf.mxu0
  %268 = vdwg.mxu0
  %v269 = vadd.f32 %v194, %v266
  %v270 = vxor.u32 %v269, 2147483648
  %v271 = vmul.f32 %v270, 1.442695
  %v272 = vpow.pop %v271
  %v273 = vadd.f32 %v272, 1.0
  %v274 = vrcp.pop %v273
  %v275 = vmul.f32 1.0, %v274
  %v276 = vtanh.pop %v269
  %v277 = vmul.f32 %v275, 0.0
  %279 = vrot.lane.b32.xlu0 %v276, 64
  %v280 = vpop.permute.xlu0 %279
  %v282 = vmul.f32 %v275, %v280
  %284 = vrot.lane.b32.xlu0 %v282, 32
  %v285 = vpop.permute.xlu0 %284
  %v287 = vadd.f32 %v277, %v285
  %v288 = vtanh.pop %v287
  %290 = vrot.lane.b32.xlu0 %v288, 64
  %v291 = vpop.permute.xlu0 %290
  %v293 = vmul.f32 %v275, %v291
  %295 = vrot.lane.b32.xlu0 %v293, 32
  %v296 = vpop.permute.xlu0 %295
  %298 = vst.msk [vmem:[#allocation3] sm:$0xff] %vm195, %v296
  %s299 = scalar_lea.vmem [#allocation2], 8
  %v300 = vld [vmem:[%s299] sm:$0xff]
  %v301 = vsel %vm195, %v296, 0
  %303 = vmatprep.subr.mxu0 0.0
  %304 = vmatpush1.msra.mxu0 0.0
  %305 = vmatprep.subr.mxu0 0.0
  %306 = vmatpush1.msra.mxu0 0.0
  %307 = vmatprep.subr.mxu0 0.0
  %308 = vmatpush1.msra.mxu0 0.0
  %309 = vmatprep.subr.mxu0 0.0
  %310 = vmatpush1.msra.mxu0 0.0
  %311 = vmatprep.subr.mxu0 0.0
  %312 = vmatpush1.msra.mxu0 0.0
  %313 = vmatprep.subr.mxu0 0.0
  %314 = vmatpush1.msra.mxu0 0.0
  %315 = vmatprep.subr.mxu0 0.0
  %316 = vmatpush1.msra.mxu0 0.0
  %317 = vmatprep.subr.mxu0 0.0
  %318 = vmatpush1.msra.mxu0 0.0
  %319 = vmatprep.subr.mxu0 0.0
  %320 = vmatpush1.msra.mxu0 0.0
  %321 = vmatprep.subr.mxu0 0.0
  %322 = vmatpush1.msra.mxu0 0.0
  %323 = vmatprep.subr.mxu0 0.0
  %324 = vmatpush1.msra.mxu0 0.0
  %325 = vmatprep.subr.mxu0 0.0
  %326 = vmatpush1.msra.mxu0 0.0
  %327 = vmatprep.subr.mxu0 0.0
  %328 = vmatpush1.msra.mxu0 %v193
  %329 = vmatprep.subr.mxu0 0.0
  %330 = vmatpush1.msra.mxu0 %v192
  %331 = vmatprep.subr.mxu0 0.0
  %332 = vmatpush1.msra.mxu0 %v191
  %333 = vmatprep.subr.mxu0 0.0
  %334 = vmatpush1.msra.mxu0 %v190
  %335 = vmatprep.subr.mxu0 0.0
  %336 = vmatpush2.msra.mxu0 0.0
  %337 = vmatprep.subr.mxu0 0.0
  %338 = vmatpush2.msra.mxu0 0.0
  %339 = vmatprep.subr.mxu0 0.0
  %340 = vmatpush2.msra.mxu0 0.0
  %341 = vmatprep.subr.mxu0 0.0
  %342 = vmatpush2.msra.mxu0 0.0
  %343 = vmatprep.subr.mxu0 0.0
  %344 = vmatpush2.msra.mxu0 0.0
  %345 = vmatprep.subr.mxu0 0.0
  %346 = vmatpush2.msra.mxu0 0.0
  %347 = vmatprep.subr.mxu0 0.0
  %348 = vmatpush2.msra.mxu0 0.0
  %349 = vmatprep.subr.mxu0 0.0
  %350 = vmatpush2.msra.mxu0 0.0
  %351 = vmatprep.subr.mxu0 0.0
  %352 = vmatpush2.msra.mxu0 0.0
  %353 = vmatprep.subr.mxu0 0.0
  %354 = vmatpush2.msra.mxu0 0.0
  %355 = vmatprep.subr.mxu0 0.0
  %356 = vmatpush2.msra.mxu0 0.0
  %357 = vmatprep.subr.mxu0 0.0
  %358 = vmatpush2.msra.mxu0 0.0
  %359 = vmatprep.subr.mxu0 0.0
  %360 = vmatpush2.msra.mxu0 0.0
  %361 = vmatprep.subr.mxu0 0.0
  %362 = vmatpush2.msra.mxu0 0.0
  %363 = vmatprep.subr.mxu0 0.0
  %364 = vmatpush2.msra.mxu0 0.0
  %365 = vmatprep.subr.mxu0 0.0
  %366 = vmatpush2.msra.mxu0 0.0
  %367 = vmatprep.mubr.f32.mxu0 0.0
  %368 = vmatmul.mubr.f32.gmra.mxu0 %v301
  %v369 = vpop.f32.mrf.mxu0
  %v370 = vadd.f32 0.0, %v369
  %v371 = vpop.f32.mrf.mxu0
  %372 = vdwg.mxu0
  %v373 = vadd.f32 %v300, %v370
  %v374 = vxor.u32 %v373, 2147483648
  %v375 = vmul.f32 %v374, 1.442695
  %v376 = vpow.pop %v375
  %v377 = vadd.f32 %v376, 1.0
  %v378 = vrcp.pop %v377
  %v379 = vmul.f32 1.0, %v378
  %v380 = vtanh.pop %v373
  %v381 = vmul.f32 %v379, %v287
  %383 = vrot.lane.b32.xlu0 %v380, 64
  %v384 = vpop.permute.xlu0 %383
  %v386 = vmul.f32 %v379, %v384
  %388 = vrot.lane.b32.xlu0 %v386, 32
  %v389 = vpop.permute.xlu0 %388
  %v391 = vadd.f32 %v381, %v389
  %v392 = vtanh.pop %v391
  %394 = vrot.lane.b32.xlu0 %v392, 64
  %v395 = vpop.permute.xlu0 %394
  %v397 = vmul.f32 %v379, %v395
  %399 = vrot.lane.b32.xlu0 %v397, 32
  %v400 = vpop.permute.xlu0 %399
  %s402 = scalar_lea.vmem [#allocation3], 8
  %403 = vst.msk [vmem:[%s402] sm:$0xff] %vm195, %v400
  %s404 = scalar_lea.vmem [#allocation2], 16
  %v405 = vld [vmem:[%s404] sm:$0xff]
  %v406 = vsel %vm195, %v400, 0
  %408 = vmatprep.subr.mxu0 0.0
  %409 = vmatpush1.msra.mxu0 0.0
  %410 = vmatprep.subr.mxu0 0.0
  %411 = vmatpush1.msra.mxu0 0.0
  %412 = vmatprep.subr.mxu0 0.0
  %413 = vmatpush1.msra.mxu0 0.0
  %414 = vmatprep.subr.mxu0 0.0
  %415 = vmatpush1.msra.mxu0 0.0
  %416 = vmatprep.subr.mxu0 0.0
  %417 = vmatpush1.msra.mxu0 0.0
  %418 = vmatprep.subr.mxu0 0.0
  %419 = vmatpush1.msra.mxu0 0.0
  %420 = vmatprep.subr.mxu0 0.0
  %421 = vmatpush1.msra.mxu0 0.0
  %422 = vmatprep.subr.mxu0 0.0
  %423 = vmatpush1.msra.mxu0 0.0
  %424 = vmatprep.subr.mxu0 0.0
  %425 = vmatpush1.msra.mxu0 0.0
  %426 = vmatprep.subr.mxu0 0.0
  %427 = vmatpush1.msra.mxu0 0.0
  %428 = vmatprep.subr.mxu0 0.0
  %429 = vmatpush1.msra.mxu0 0.0
  %430 = vmatprep.subr.mxu0 0.0
  %431 = vmatpush1.msra.mxu0 0.0
  %432 = vmatprep.subr.mxu0 0.0
  %433 = vmatpush1.msra.mxu0 %v193
  %434 = vmatprep.subr.mxu0 0.0
  %435 = vmatpush1.msra.mxu0 %v192
  %436 = vmatprep.subr.mxu0 0.0
  %437 = vmatpush1.msra.mxu0 %v191
  %438 = vmatprep.subr.mxu0 0.0
  %439 = vmatpush1.msra.mxu0 %v190
  %440 = vmatprep.subr.mxu0 0.0
  %441 = vmatpush2.msra.mxu0 0.0
  %442 = vmatprep.subr.mxu0 0.0
  %443 = vmatpush2.msra.mxu0 0.0
  %444 = vmatprep.subr.mxu0 0.0
  %445 = vmatpush2.msra.mxu0 0.0
  %446 = vmatprep.subr.mxu0 0.0
  %447 = vmatpush2.msra.mxu0 0.0
  %448 = vmatprep.subr.mxu0 0.0
  %449 = vmatpush2.msra.mxu0 0.0
  %450 = vmatprep.subr.mxu0 0.0
  %451 = vmatpush2.msra.mxu0 0.0
  %452 = vmatprep.subr.mxu0 0.0
  %453 = vmatpush2.msra.mxu0 0.0
  %454 = vmatprep.subr.mxu0 0.0
  %455 = vmatpush2.msra.mxu0 0.0
  %456 = vmatprep.subr.mxu0 0.0
  %457 = vmatpush2.msra.mxu0 0.0
  %458 = vmatprep.subr.mxu0 0.0
  %459 = vmatpush2.msra.mxu0 0.0
  %460 = vmatprep.subr.mxu0 0.0
  %461 = vmatpush2.msra.mxu0 0.0
  %462 = vmatprep.subr.mxu0 0.0
  %463 = vmatpush2.msra.mxu0 0.0
  %464 = vmatprep.subr.mxu0 0.0
  %465 = vmatpush2.msra.mxu0 0.0
  %466 = vmatprep.subr.mxu0 0.0
  %467 = vmatpush2.msra.mxu0 0.0
  %468 = vmatprep.subr.mxu0 0.0
  %469 = vmatpush2.msra.mxu0 0.0
  %470 = vmatprep.subr.mxu0 0.0
  %471 = vmatpush2.msra.mxu0 0.0
  %472 = vmatprep.mubr.f32.mxu0 0.0
  %473 = vmatmul.mubr.f32.gmra.mxu0 %v406
  %v474 = vpop.f32.mrf.mxu0
  %v475 = vadd.f32 0.0, %v474
  %v476 = vpop.f32.mrf.mxu0
  %477 = vdwg.mxu0
  %v478 = vadd.f32 %v405, %v475
  %v479 = vxor.u32 %v478, 2147483648
  %v480 = vmul.f32 %v479, 1.442695
  %v481 = vpow.pop %v480
  %v482 = vadd.f32 %v481, 1.0
  %v483 = vrcp.pop %v482
  %v484 = vmul.f32 1.0, %v483
  %v485 = vtanh.pop %v478
  %v486 = vmul.f32 %v484, %v391
  %488 = vrot.lane.b32.xlu0 %v485, 64
  %v489 = vpop.permute.xlu0 %488
  %v491 = vmul.f32 %v484, %v489
  %493 = vrot.lane.b32.xlu0 %v491, 32
  %v494 = vpop.permute.xlu0 %493
  %v496 = vadd.f32 %v486, %v494
  %v497 = vtanh.pop %v496
  %499 = vrot.lane.b32.xlu0 %v497, 64
  %v500 = vpop.permute.xlu0 %499
  %v502 = vmul.f32 %v484, %v500
  %504 = vrot.lane.b32.xlu0 %v502, 32
  %v505 = vpop.permute.xlu0 %504
  %s507 = scalar_lea.vmem [#allocation3], 16
  %508 = vst.msk [vmem:[%s507] sm:$0xff] %vm195, %v505
  %s509 = scalar_lea.vmem [#allocation2], 24
  %v510 = vld [vmem:[%s509] sm:$0xff]
  %v511 = vsel %vm195, %v505, 0
  %513 = vmatprep.subr.mxu0 0.0
  %514 = vmatpush1.msra.mxu0 0.0
  %515 = vmatprep.subr.mxu0 0.0
  %516 = vmatpush1.msra.mxu0 0.0
  %517 = vmatprep.subr.mxu0 0.0
  %518 = vmatpush1.msra.mxu0 0.0
  %519 = vmatprep.subr.mxu0 0.0
  %520 = vmatpush1.msra.mxu0 0.0
  %521 = vmatprep.subr.mxu0 0.0
  %522 = vmatpush1.msra.mxu0 0.0
  %523 = vmatprep.subr.mxu0 0.0
  %524 = vmatpush1.msra.mxu0 0.0
  %525 = vmatprep.subr.mxu0 0.0
  %526 = vmatpush1.msra.mxu0 0.0
  %527 = vmatprep.subr.mxu0 0.0
  %528 = vmatpush1.msra.mxu0 0.0
  %529 = vmatprep.subr.mxu0 0.0
  %530 = vmatpush1.msra.mxu0 0.0
  %531 = vmatprep.subr.mxu0 0.0
  %532 = vmatpush1.msra.mxu0 0.0
  %533 = vmatprep.subr.mxu0 0.0
  %534 = vmatpush1.msra.mxu0 0.0
  %535 = vmatprep.subr.mxu0 0.0
  %536 = vmatpush1.msra.mxu0 0.0
  %537 = vmatprep.subr.mxu0 0.0
  %538 = vmatpush1.msra.mxu0 %v193
  %539 = vmatprep.subr.mxu0 0.0
  %540 = vmatpush1.msra.mxu0 %v192
  %541 = vmatprep.subr.mxu0 0.0
  %542 = vmatpush1.msra.mxu0 %v191
  %543 = vmatprep.subr.mxu0 0.0
  %544 = vmatpush1.msra.mxu0 %v190
  %545 = vmatprep.subr.mxu0 0.0
  %546 = vmatpush2.msra.mxu0 0.0
  %547 = vmatprep.subr.mxu0 0.0
  %548 = vmatpush2.msra.mxu0 0.0
  %549 = vmatprep.subr.mxu0 0.0
  %550 = vmatpush2.msra.mxu0 0.0
  %551 = vmatprep.subr.mxu0 0.0
  %552 = vmatpush2.msra.mxu0 0.0
  %553 = vmatprep.subr.mxu0 0.0
  %554 = vmatpush2.msra.mxu0 0.0
  %555 = vmatprep.subr.mxu0 0.0
  %556 = vmatpush2.msra.mxu0 0.0
  %557 = vmatprep.subr.mxu0 0.0
  %558 = vmatpush2.msra.mxu0 0.0
  %559 = vmatprep.subr.mxu0 0.0
  %560 = vmatpush2.msra.mxu0 0.0
  %561 = vmatprep.subr.mxu0 0.0
  %562 = vmatpush2.msra.mxu0 0.0
  %563 = vmatprep.subr.mxu0 0.0
  %564 = vmatpush2.msra.mxu0 0.0
  %565 = vmatprep.subr.mxu0 0.0
  %566 = vmatpush2.msra.mxu0 0.0
  %567 = vmatprep.subr.mxu0 0.0
  %568 = vmatpush2.msra.mxu0 0.0
  %569 = vmatprep.subr.mxu0 0.0
  %570 = vmatpush2.msra.mxu0 0.0
  %571 = vmatprep.subr.mxu0 0.0
  %572 = vmatpush2.msra.mxu0 0.0
  %573 = vmatprep.subr.mxu0 0.0
  %574 = vmatpush2.msra.mxu0 0.0
  %575 = vmatprep.subr.mxu0 0.0
  %576 = vmatpush2.msra.mxu0 0.0
  %577 = vmatprep.mubr.f32.mxu0 0.0
  %578 = vmatmul.mubr.f32.gmra.mxu0 %v511
  %v579 = vpop.f32.mrf.mxu0
  %v580 = vadd.f32 0.0, %v579
  %v581 = vpop.f32.mrf.mxu0
  %582 = vdwg.mxu0
  %v583 = vadd.f32 %v510, %v580
  %v584 = vxor.u32 %v583, 2147483648
  %v585 = vmul.f32 %v584, 1.442695
  %v586 = vpow.pop %v585
  %v587 = vadd.f32 %v586, 1.0
  %v588 = vrcp.pop %v587
  %v589 = vmul.f32 1.0, %v588
  %v590 = vtanh.pop %v583
  %v591 = vmul.f32 %v589, %v496
  %593 = vrot.lane.b32.xlu0 %v590, 64
  %v594 = vpop.permute.xlu0 %593
  %v596 = vmul.f32 %v589, %v594
  %598 = vrot.lane.b32.xlu0 %v596, 32
  %v599 = vpop.permute.xlu0 %598
  %v601 = vadd.f32 %v591, %v599
  %v602 = vtanh.pop %v601
  %604 = vrot.lane.b32.xlu0 %v602, 64
  %v605 = vpop.permute.xlu0 %604
  %v607 = vmul.f32 %v589, %v605
  %609 = vrot.lane.b32.xlu0 %v607, 32
  %v610 = vpop.permute.xlu0 %609
  %s612 = scalar_lea.vmem [#allocation3], 24
  %613 = vst.msk [vmem:[%s612] sm:$0xff] %vm195, %v610
  %s614 = scalar_lea.vmem [#allocation2], 32
  %v615 = vld [vmem:[%s614] sm:$0xff]
  %v616 = vsel %vm195, %v610, 0
  %618 = vmatprep.subr.mxu0 0.0
  %619 = vmatpush1.msra.mxu0 0.0
  %620 = vmatprep.subr.mxu0 0.0
  %621 = vmatpush1.msra.mxu0 0.0
  %622 = vmatprep.subr.mxu0 0.0
  %623 = vmatpush1.msra.mxu0 0.0
  %624 = vmatprep.subr.mxu0 0.0
  %625 = vmatpush1.msra.mxu0 0.0
  %626 = vmatprep.subr.mxu0 0.0
  %627 = vmatpush1.msra.mxu0 0.0
  %628 = vmatprep.subr.mxu0 0.0
  %629 = vmatpush1.msra.mxu0 0.0
  %630 = vmatprep.subr.mxu0 0.0
  %631 = vmatpush1.msra.mxu0 0.0
  %632 = vmatprep.subr.mxu0 0.0
  %633 = vmatpush1.msra.mxu0 0.0
  %634 = vmatprep.subr.mxu0 0.0
  %635 = vmatpush1.msra.mxu0 0.0
  %636 = vmatprep.subr.mxu0 0.0
  %637 = vmatpush1.msra.mxu0 0.0
  %638 = vmatprep.subr.mxu0 0.0
  %639 = vmatpush1.msra.mxu0 0.0
  %640 = vmatprep.subr.mxu0 0.0
  %641 = vmatpush1.msra.mxu0 0.0
  %642 = vmatprep.subr.mxu0 0.0
  %643 = vmatpush1.msra.mxu0 %v193
  %644 = vmatprep.subr.mxu0 0.0
  %645 = vmatpush1.msra.mxu0 %v192
  %646 = vmatprep.subr.mxu0 0.0
  %647 = vmatpush1.msra.mxu0 %v191
  %648 = vmatprep.subr.mxu0 0.0
  %649 = vmatpush1.msra.mxu0 %v190
  %650 = vmatprep.subr.mxu0 0.0
  %651 = vmatpush2.msra.mxu0 0.0
  %652 = vmatprep.subr.mxu0 0.0
  %653 = vmatpush2.msra.mxu0 0.0
  %654 = vmatprep.subr.mxu0 0.0
  %655 = vmatpush2.msra.mxu0 0.0
  %656 = vmatprep.subr.mxu0 0.0
  %657 = vmatpush2.msra.mxu0 0.0
  %658 = vmatprep.subr.mxu0 0.0
  %659 = vmatpush2.msra.mxu0 0.0
  %660 = vmatprep.subr.mxu0 0.0
  %661 = vmatpush2.msra.mxu0 0.0
  %662 = vmatprep.subr.mxu0 0.0
  %663 = vmatpush2.msra.mxu0 0.0
  %664 = vmatprep.subr.mxu0 0.0
  %665 = vmatpush2.msra.mxu0 0.0
  %666 = vmatprep.subr.mxu0 0.0
  %667 = vmatpush2.msra.mxu0 0.0
  %668 = vmatprep.subr.mxu0 0.0
  %669 = vmatpush2.msra.mxu0 0.0
  %670 = vmatprep.subr.mxu0 0.0
  %671 = vmatpush2.msra.mxu0 0.0
  %672 = vmatprep.subr.mxu0 0.0
  %673 = vmatpush2.msra.mxu0 0.0
  %674 = vmatprep.subr.mxu0 0.0
  %675 = vmatpush2.msra.mxu0 0.0
  %676 = vmatprep.subr.mxu0 0.0
  %677 = vmatpush2.msra.mxu0 0.0
  %678 = vmatprep.subr.mxu0 0.0
  %679 = vmatpush2.msra.mxu0 0.0
  %680 = vmatprep.subr.mxu0 0.0
  %681 = vmatpush2.msra.mxu0 0.0
  %682 = vmatprep.mubr.f32.mxu0 0.0
  %683 = vmatmul.mubr.f32.gmra.mxu0 %v616
  %v684 = vpop.f32.mrf.mxu0
  %v685 = vadd.f32 0.0, %v684
  %v686 = vpop.f32.mrf.mxu0
  %687 = vdwg.mxu0
  %v688 = vadd.f32 %v615, %v685
  %v689 = vxor.u32 %v688, 2147483648
  %v690 = vmul.f32 %v689, 1.442695
  %v691 = vpow.pop %v690
  %v692 = vadd.f32 %v691, 1.0
  %v693 = vrcp.pop %v692
  %v694 = vmul.f32 1.0, %v693
  %v695 = vtanh.pop %v688
  %v696 = vmul.f32 %v694, %v601
  %698 = vrot.lane.b32.xlu0 %v695, 64
  %v699 = vpop.permute.xlu0 %698
  %v701 = vmul.f32 %v694, %v699
  %703 = vrot.lane.b32.xlu0 %v701, 32
  %v704 = vpop.permute.xlu0 %703
  %v706 = vadd.f32 %v696, %v704
  %v707 = vtanh.pop %v706
  %709 = vrot.lane.b32.xlu0 %v707, 64
  %v710 = vpop.permute.xlu0 %709
  %v712 = vmul.f32 %v694, %v710
  %714 = vrot.lane.b32.xlu0 %v712, 32
  %v715 = vpop.permute.xlu0 %714
  %s717 = scalar_lea.vmem [#allocation3], 32
  %718 = vst.msk [vmem:[%s717] sm:$0xff] %vm195, %v715
  %s719 = scalar_lea.vmem [#allocation2], 40
  %v720 = vld [vmem:[%s719] sm:$0xff]
  %v721 = vsel %vm195, %v715, 0
  %723 = vmatprep.subr.mxu0 0.0
  %724 = vmatpush1.msra.mxu0 0.0
  %725 = vmatprep.subr.mxu0 0.0
  %726 = vmatpush1.msra.mxu0 0.0
  %727 = vmatprep.subr.mxu0 0.0
  %728 = vmatpush1.msra.mxu0 0.0
  %729 = vmatprep.subr.mxu0 0.0
  %730 = vmatpush1.msra.mxu0 0.0
  %731 = vmatprep.subr.mxu0 0.0
  %732 = vmatpush1.msra.mxu0 0.0
  %733 = vmatprep.subr.mxu0 0.0
  %734 = vmatpush1.msra.mxu0 0.0
  %735 = vmatprep.subr.mxu0 0.0
  %736 = vmatpush1.msra.mxu0 0.0
  %737 = vmatprep.subr.mxu0 0.0
  %738 = vmatpush1.msra.mxu0 0.0
  %739 = vmatprep.subr.mxu0 0.0
  %740 = vmatpush1.msra.mxu0 0.0
  %741 = vmatprep.subr.mxu0 0.0
  %742 = vmatpush1.msra.mxu0 0.0
  %743 = vmatprep.subr.mxu0 0.0
  %744 = vmatpush1.msra.mxu0 0.0
  %745 = vmatprep.subr.mxu0 0.0
  %746 = vmatpush1.msra.mxu0 0.0
  %747 = vmatprep.subr.mxu0 0.0
  %748 = vmatpush1.msra.mxu0 %v193
  %749 = vmatprep.subr.mxu0 0.0
  %750 = vmatpush1.msra.mxu0 %v192
  %751 = vmatprep.subr.mxu0 0.0
  %752 = vmatpush1.msra.mxu0 %v191
  %753 = vmatprep.subr.mxu0 0.0
  %754 = vmatpush1.msra.mxu0 %v190
  %755 = vmatprep.subr.mxu0 0.0
  %756 = vmatpush2.msra.mxu0 0.0
  %757 = vmatprep.subr.mxu0 0.0
  %758 = vmatpush2.msra.mxu0 0.0
  %759 = vmatprep.subr.mxu0 0.0
  %760 = vmatpush2.msra.mxu0 0.0
  %761 = vmatprep.subr.mxu0 0.0
  %762 = vmatpush2.msra.mxu0 0.0
  %763 = vmatprep.subr.mxu0 0.0
  %764 = vmatpush2.msra.mxu0 0.0
  %765 = vmatprep.subr.mxu0 0.0
  %766 = vmatpush2.msra.mxu0 0.0
  %767 = vmatprep.subr.mxu0 0.0
  %768 = vmatpush2.msra.mxu0 0.0
  %769 = vmatprep.subr.mxu0 0.0
  %770 = vmatpush2.msra.mxu0 0.0
  %771 = vmatprep.subr.mxu0 0.0
  %772 = vmatpush2.msra.mxu0 0.0
  %773 = vmatprep.subr.mxu0 0.0
  %774 = vmatpush2.msra.mxu0 0.0
  %775 = vmatprep.subr.mxu0 0.0
  %776 = vmatpush2.msra.mxu0 0.0
  %777 = vmatprep.subr.mxu0 0.0
  %778 = vmatpush2.msra.mxu0 0.0
  %779 = vmatprep.subr.mxu0 0.0
  %780 = vmatpush2.msra.mxu0 0.0
  %781 = vmatprep.subr.mxu0 0.0
  %782 = vmatpush2.msra.mxu0 0.0
  %783 = vmatprep.subr.mxu0 0.0
  %784 = vmatpush2.msra.mxu0 0.0
  %785 = vmatprep.subr.mxu0 0.0
  %786 = vmatpush2.msra.mxu0 0.0
  %787 = vmatprep.mubr.f32.mxu0 0.0
  %788 = vmatmul.mubr.f32.gmra.mxu0 %v721
  %v789 = vpop.f32.mrf.mxu0
  %v790 = vadd.f32 0.0, %v789
  %v791 = vpop.f32.mrf.mxu0
  %792 = vdwg.mxu0
  %v793 = vadd.f32 %v720, %v790
  %v794 = vxor.u32 %v793, 2147483648
  %v795 = vmul.f32 %v794, 1.442695
  %v796 = vpow.pop %v795
  %v797 = vadd.f32 %v796, 1.0
  %v798 = vrcp.pop %v797
  %v799 = vmul.f32 1.0, %v798
  %v800 = vtanh.pop %v793
  %v801 = vmul.f32 %v799, %v706
  %803 = vrot.lane.b32.xlu0 %v800, 64
  %v804 = vpop.permute.xlu0 %803
  %v806 = vmul.f32 %v799, %v804
  %808 = vrot.lane.b32.xlu0 %v806, 32
  %v809 = vpop.permute.xlu0 %808
  %v811 = vadd.f32 %v801, %v809
  %v812 = vtanh.pop %v811
  %814 = vrot.lane.b32.xlu0 %v812, 64
  %v815 = vpop.permute.xlu0 %814
  %v817 = vmul.f32 %v799, %v815
  %819 = vrot.lane.b32.xlu0 %v817, 32
  %v820 = vpop.permute.xlu0 %819
  %s822 = scalar_lea.vmem [#allocation3], 40
  %823 = vst.msk [vmem:[%s822] sm:$0xff] %vm195, %v820
  %s824 = scalar_lea.vmem [#allocation2], 48
  %v825 = vld [vmem:[%s824] sm:$0xff]
  %v826 = vsel %vm195, %v820, 0
  %828 = vmatprep.subr.mxu0 0.0
  %829 = vmatpush1.msra.mxu0 0.0
  %830 = vmatprep.subr.mxu0 0.0
  %831 = vmatpush1.msra.mxu0 0.0
  %832 = vmatprep.subr.mxu0 0.0
  %833 = vmatpush1.msra.mxu0 0.0
  %834 = vmatprep.subr.mxu0 0.0
  %835 = vmatpush1.msra.mxu0 0.0
  %836 = vmatprep.subr.mxu0 0.0
  %837 = vmatpush1.msra.mxu0 0.0
  %838 = vmatprep.subr.mxu0 0.0
  %839 = vmatpush1.msra.mxu0 0.0
  %840 = vmatprep.subr.mxu0 0.0
  %841 = vmatpush1.msra.mxu0 0.0
  %842 = vmatprep.subr.mxu0 0.0
  %843 = vmatpush1.msra.mxu0 0.0
  %844 = vmatprep.subr.mxu0 0.0
  %845 = vmatpush1.msra.mxu0 0.0
  %846 = vmatprep.subr.mxu0 0.0
  %847 = vmatpush1.msra.mxu0 0.0
  %848 = vmatprep.subr.mxu0 0.0
  %849 = vmatpush1.msra.mxu0 0.0
  %850 = vmatprep.subr.mxu0 0.0
  %851 = vmatpush1.msra.mxu0 0.0
  %852 = vmatprep.subr.mxu0 0.0
  %853 = vmatpush1.msra.mxu0 %v193
  %854 = vmatprep.subr.mxu0 0.0
  %855 = vmatpush1.msra.mxu0 %v192
  %856 = vmatprep.subr.mxu0 0.0
  %857 = vmatpush1.msra.mxu0 %v191
  %858 = vmatprep.subr.mxu0 0.0
  %859 = vmatpush1.msra.mxu0 %v190
  %860 = vmatprep.subr.mxu0 0.0
  %861 = vmatpush2.msra.mxu0 0.0
  %862 = vmatprep.subr.mxu0 0.0
  %863 = vmatpush2.msra.mxu0 0.0
  %864 = vmatprep.subr.mxu0 0.0
  %865 = vmatpush2.msra.mxu0 0.0
  %866 = vmatprep.subr.mxu0 0.0
  %867 = vmatpush2.msra.mxu0 0.0
  %868 = vmatprep.subr.mxu0 0.0
  %869 = vmatpush2.msra.mxu0 0.0
  %870 = vmatprep.subr.mxu0 0.0
  %871 = vmatpush2.msra.mxu0 0.0
  %872 = vmatprep.subr.mxu0 0.0
  %873 = vmatpush2.msra.mxu0 0.0
  %874 = vmatprep.subr.mxu0 0.0
  %875 = vmatpush2.msra.mxu0 0.0
  %876 = vmatprep.subr.mxu0 0.0
  %877 = vmatpush2.msra.mxu0 0.0
  %878 = vmatprep.subr.mxu0 0.0
  %879 = vmatpush2.msra.mxu0 0.0
  %880 = vmatprep.subr.mxu0 0.0
  %881 = vmatpush2.msra.mxu0 0.0
  %882 = vmatprep.subr.mxu0 0.0
  %883 = vmatpush2.msra.mxu0 0.0
  %884 = vmatprep.subr.mxu0 0.0
  %885 = vmatpush2.msra.mxu0 0.0
  %886 = vmatprep.subr.mxu0 0.0
  %887 = vmatpush2.msra.mxu0 0.0
  %888 = vmatprep.subr.mxu0 0.0
  %889 = vmatpush2.msra.mxu0 0.0
  %890 = vmatprep.subr.mxu0 0.0
  %891 = vmatpush2.msra.mxu0 0.0
  %892 = vmatprep.mubr.f32.mxu0 0.0
  %893 = vmatmul.mubr.f32.gmra.mxu0 %v826
  %v894 = vpop.f32.mrf.mxu0
  %v895 = vadd.f32 0.0, %v894
  %v896 = vpop.f32.mrf.mxu0
  %897 = vdwg.mxu0
  %v898 = vadd.f32 %v825, %v895
  %v899 = vxor.u32 %v898, 2147483648
  %v900 = vmul.f32 %v899, 1.442695
  %v901 = vpow.pop %v900
  %v902 = vadd.f32 %v901, 1.0
  %v903 = vrcp.pop %v902
  %v904 = vmul.f32 1.0, %v903
  %v905 = vtanh.pop %v898
  %v906 = vmul.f32 %v904, %v811
  %908 = vrot.lane.b32.xlu0 %v905, 64
  %v909 = vpop.permute.xlu0 %908
  %v911 = vmul.f32 %v904, %v909
  %913 = vrot.lane.b32.xlu0 %v911, 32
  %v914 = vpop.permute.xlu0 %913
  %v916 = vadd.f32 %v906, %v914
  %v917 = vtanh.pop %v916
  %919 = vrot.lane.b32.xlu0 %v917, 64
  %v920 = vpop.permute.xlu0 %919
  %v922 = vmul.f32 %v904, %v920
  %924 = vrot.lane.b32.xlu0 %v922, 32
  %v925 = vpop.permute.xlu0 %924
  %s927 = scalar_lea.vmem [#allocation3], 48
  %928 = vst.msk [vmem:[%s927] sm:$0xff] %vm195, %v925
  %s929 = scalar_lea.vmem [#allocation2], 56
  %v930 = vld [vmem:[%s929] sm:$0xff]
  %v931 = vsel %vm195, %v925, 0
  %933 = vmatprep.subr.mxu0 0.0
  %934 = vmatpush1.msra.mxu0 0.0
  %935 = vmatprep.subr.mxu0 0.0
  %936 = vmatpush1.msra.mxu0 0.0
  %937 = vmatprep.subr.mxu0 0.0
  %938 = vmatpush1.msra.mxu0 0.0
  %939 = vmatprep.subr.mxu0 0.0
  %940 = vmatpush1.msra.mxu0 0.0
  %941 = vmatprep.subr.mxu0 0.0
  %942 = vmatpush1.msra.mxu0 0.0
  %943 = vmatprep.subr.mxu0 0.0
  %944 = vmatpush1.msra.mxu0 0.0
  %945 = vmatprep.subr.mxu0 0.0
  %946 = vmatpush1.msra.mxu0 0.0
  %947 = vmatprep.subr.mxu0 0.0
  %948 = vmatpush1.msra.mxu0 0.0
  %949 = vmatprep.subr.mxu0 0.0
  %950 = vmatpush1.msra.mxu0 0.0
  %951 = vmatprep.subr.mxu0 0.0
  %952 = vmatpush1.msra.mxu0 0.0
  %953 = vmatprep.subr.mxu0 0.0
  %954 = vmatpush1.msra.mxu0 0.0
  %955 = vmatprep.subr.mxu0 0.0
  %956 = vmatpush1.msra.mxu0 0.0
  %957 = vmatprep.subr.mxu0 0.0
  %958 = vmatpush1.msra.mxu0 %v193
  %959 = vmatprep.subr.mxu0 0.0
  %960 = vmatpush1.msra.mxu0 %v192
  %961 = vmatprep.subr.mxu0 0.0
  %962 = vmatpush1.msra.mxu0 %v191
  %963 = vmatprep.subr.mxu0 0.0
  %964 = vmatpush1.msra.mxu0 %v190
  %965 = vmatprep.subr.mxu0 0.0
  %966 = vmatpush2.msra.mxu0 0.0
  %967 = vmatprep.subr.mxu0 0.0
  %968 = vmatpush2.msra.mxu0 0.0
  %969 = vmatprep.subr.mxu0 0.0
  %970 = vmatpush2.msra.mxu0 0.0
  %971 = vmatprep.subr.mxu0 0.0
  %972 = vmatpush2.msra.mxu0 0.0
  %973 = vmatprep.subr.mxu0 0.0
  %974 = vmatpush2.msra.mxu0 0.0
  %975 = vmatprep.subr.mxu0 0.0
  %976 = vmatpush2.msra.mxu0 0.0
  %977 = vmatprep.subr.mxu0 0.0
  %978 = vmatpush2.msra.mxu0 0.0
  %979 = vmatprep.subr.mxu0 0.0
  %980 = vmatpush2.msra.mxu0 0.0
  %981 = vmatprep.subr.mxu0 0.0
  %982 = vmatpush2.msra.mxu0 0.0
  %983 = vmatprep.subr.mxu0 0.0
  %984 = vmatpush2.msra.mxu0 0.0
  %985 = vmatprep.subr.mxu0 0.0
  %986 = vmatpush2.msra.mxu0 0.0
  %987 = vmatprep.subr.mxu0 0.0
  %988 = vmatpush2.msra.mxu0 0.0
  %989 = vmatprep.subr.mxu0 0.0
  %990 = vmatpush2.msra.mxu0 0.0
  %991 = vmatprep.subr.mxu0 0.0
  %992 = vmatpush2.msra.mxu0 0.0
  %993 = vmatprep.subr.mxu0 0.0
  %994 = vmatpush2.msra.mxu0 0.0
  %995 = vmatprep.subr.mxu0 0.0
  %996 = vmatpush2.msra.mxu0 0.0
  %997 = vmatprep.mubr.f32.mxu0 0.0
  %998 = vmatmul.mubr.f32.gmra.mxu0 %v931
  %v999 = vpop.f32.mrf.mxu0
  %v1000 = vadd.f32 0.0, %v999
  %v1001 = vpop.f32.mrf.mxu0
  %1002 = vdwg.mxu0
  %v1003 = vadd.f32 %v930, %v1000
  %v1004 = vxor.u32 %v1003, 2147483648
  %v1005 = vmul.f32 %v1004, 1.442695
  %v1006 = vpow.pop %v1005
  %v1007 = vadd.f32 %v1006, 1.0
  %v1008 = vrcp.pop %v1007
  %v1009 = vmul.f32 1.0, %v1008
  %v1010 = vtanh.pop %v1003
  %v1011 = vmul.f32 %v1009, %v916
  %1013 = vrot.lane.b32.xlu0 %v1010, 64
  %v1014 = vpop.permute.xlu0 %1013
  %v1016 = vmul.f32 %v1009, %v1014
  %1018 = vrot.lane.b32.xlu0 %v1016, 32
  %v1019 = vpop.permute.xlu0 %1018
  %v1021 = vadd.f32 %v1011, %v1019
  %v1022 = vtanh.pop %v1021
  %1024 = vrot.lane.b32.xlu0 %v1022, 64
  %v1025 = vpop.permute.xlu0 %1024
  %v1027 = vmul.f32 %v1009, %v1025
  %1029 = vrot.lane.b32.xlu0 %v1027, 32
  %v1030 = vpop.permute.xlu0 %1029
  %s1032 = scalar_lea.vmem [#allocation3], 56
  %1033 = vst.msk [vmem:[%s1032] sm:$0xff] %vm195, %v1030
  %v1034 = vld [vmem:[#allocation3] sm:$0xff]
  %v1035 = vld [vmem:[#allocation3 + $0x8] sm:$0xff]
  %v1036 = vld [vmem:[#allocation3 + $0x10] sm:$0xff]
  %v1037 = vld [vmem:[#allocation3 + $0x18] sm:$0xff]
  %v1038 = vld [vmem:[#allocation3 + $0x20] sm:$0xff]
  %v1039 = vld [vmem:[#allocation3 + $0x28] sm:$0xff]
  %v1040 = vld [vmem:[#allocation3 + $0x30] sm:$0xff]
  %v1041 = vld [vmem:[#allocation3 + $0x38] sm:$0xff]
  %v1042 = vld [vmem:[%s4] sm:$0xff]
  %v1043 = vld [vmem:[%s4 + $0x8] sm:$0xff]
  %v1044 = vld [vmem:[%s4 + $0x10] sm:$0xff]
  %v1045 = vld [vmem:[%s4 + $0x18] sm:$0xff]
  %v1046 = vld [vmem:[%s6] sm:$0x1]
  %v1048 = vlaneseq
  %v1049 = vshrl.u32 %v1048, 7
  %v1050 = vsub.s32 0, %v1049
  %v1051 = vrot.slane %v1046, %v1050
  %v1054 = vsel %vm195, %v1034, 0
  %v1057 = vsel %vm195, %v1035, 0
  %v1060 = vsel %vm195, %v1036, 0
  %v1063 = vsel %vm195, %v1037, 0
  %v1066 = vsel %vm195, %v1038, 0
  %v1069 = vsel %vm195, %v1039, 0
  %v1072 = vsel %vm195, %v1040, 0
  %v1075 = vsel %vm195, %v1041, 0
  %1077 = vmatprep.subr.mxu0 0.0
  %1078 = vmatpush1.msra.mxu0 0.0
  %1079 = vmatprep.subr.mxu0 0.0
  %1080 = vmatpush1.msra.mxu0 0.0
  %1081 = vmatprep.subr.mxu0 0.0
  %1082 = vmatpush1.msra.mxu0 0.0
  %1083 = vmatprep.subr.mxu0 0.0
  %1084 = vmatpush1.msra.mxu0 0.0
  %1085 = vmatprep.subr.mxu0 0.0
  %1086 = vmatpush1.msra.mxu0 0.0
  %1087 = vmatprep.subr.mxu0 0.0
  %1088 = vmatpush1.msra.mxu0 0.0
  %1089 = vmatprep.subr.mxu0 0.0
  %1090 = vmatpush1.msra.mxu0 0.0
  %1091 = vmatprep.subr.mxu0 0.0
  %1092 = vmatpush1.msra.mxu0 0.0
  %1093 = vmatprep.subr.mxu0 0.0
  %1094 = vmatpush1.msra.mxu0 0.0
  %1095 = vmatprep.subr.mxu0 0.0
  %1096 = vmatpush1.msra.mxu0 0.0
  %1097 = vmatprep.subr.mxu0 0.0
  %1098 = vmatpush1.msra.mxu0 0.0
  %1099 = vmatprep.subr.mxu0 0.0
  %1100 = vmatpush1.msra.mxu0 0.0
  %1101 = vmatprep.subr.mxu0 0.0
  %1102 = vmatpush1.msra.mxu0 %v1045
  %1103 = vmatprep.subr.mxu0 0.0
  %1104 = vmatpush1.msra.mxu0 %v1044
  %1105 = vmatprep.subr.mxu0 0.0
  %1106 = vmatpush1.msra.mxu0 %v1043
  %1107 = vmatprep.subr.mxu0 0.0
  %1108 = vmatpush1.msra.mxu0 %v1042
  %1109 = vmatprep.subr.mxu0 0.0
  %1110 = vmatpush2.msra.mxu0 0.0
  %1111 = vmatprep.subr.mxu0 0.0
  %1112 = vmatpush2.msra.mxu0 0.0
  %1113 = vmatprep.subr.mxu0 0.0
  %1114 = vmatpush2.msra.mxu0 0.0
  %1115 = vmatprep.subr.mxu0 0.0
  %1116 = vmatpush2.msra.mxu0 0.0
  %1117 = vmatprep.subr.mxu0 0.0
  %1118 = vmatpush2.msra.mxu0 0.0
  %1119 = vmatprep.subr.mxu0 0.0
  %1120 = vmatpush2.msra.mxu0 0.0
  %1121 = vmatprep.subr.mxu0 0.0
  %1122 = vmatpush2.msra.mxu0 0.0
  %1123 = vmatprep.subr.mxu0 0.0
  %1124 = vmatpush2.msra.mxu0 0.0
  %1125 = vmatprep.subr.mxu0 0.0
  %1126 = vmatpush2.msra.mxu0 0.0
  %1127 = vmatprep.subr.mxu0 0.0
  %1128 = vmatpush2.msra.mxu0 0.0
  %1129 = vmatprep.subr.mxu0 0.0
  %1130 = vmatpush2.msra.mxu0 0.0
  %1131 = vmatprep.subr.mxu0 0.0
  %1132 = vmatpush2.msra.mxu0 0.0
  %1133 = vmatprep.subr.mxu0 0.0
  %1134 = vmatpush2.msra.mxu0 0.0
  %1135 = vmatprep.subr.mxu0 0.0
  %1136 = vmatpush2.msra.mxu0 0.0
  %1137 = vmatprep.subr.mxu0 0.0
  %1138 = vmatpush2.msra.mxu0 0.0
  %1139 = vmatprep.subr.mxu0 0.0
  %1140 = vmatpush2.msra.mxu0 0.0
  %1141 = vmatprep.mubr.f32.mxu0 0.0
  %1142 = vmatmul.mubr.f32.gmra.mxu0 %v1054
  %v1143 = vpop.f32.mrf.mxu0
  %v1144 = vadd.f32 %v1051, %v1143
  %v1145 = vpop.f32.mrf.mxu0
  %1146 = vmatprep.mubr.f32.mxu0 0.0
  %1147 = vmatmul.mubr.f32.gmra.mxu0 %v1057
  %v1148 = vpop.f32.mrf.mxu0
  %v1149 = vadd.f32 %v1051, %v1148
  %v1150 = vpop.f32.mrf.mxu0
  %1151 = vmatprep.mubr.f32.mxu0 0.0
  %1152 = vmatmul.mubr.f32.gmra.mxu0 %v1060
  %v1153 = vpop.f32.mrf.mxu0
  %v1154 = vadd.f32 %v1051, %v1153
  %v1155 = vpop.f32.mrf.mxu0
  %1156 = vmatprep.mubr.f32.mxu0 0.0
  %1157 = vmatmul.mubr.f32.gmra.mxu0 %v1063
  %v1158 = vpop.f32.mrf.mxu0
  %v1159 = vadd.f32 %v1051, %v1158
  %v1160 = vpop.f32.mrf.mxu0
  %1161 = vmatprep.mubr.f32.mxu0 0.0
  %1162 = vmatmul.mubr.f32.gmra.mxu0 %v1066
  %v1163 = vpop.f32.mrf.mxu0
  %v1164 = vadd.f32 %v1051, %v1163
  %v1165 = vpop.f32.mrf.mxu0
  %1166 = vmatprep.mubr.f32.mxu0 0.0
  %1167 = vmatmul.mubr.f32.gmra.mxu0 %v1069
  %v1168 = vpop.f32.mrf.mxu0
  %v1169 = vadd.f32 %v1051, %v1168
  %v1170 = vpop.f32.mrf.mxu0
  %1171 = vmatprep.mubr.f32.mxu0 0.0
  %1172 = vmatmul.mubr.f32.gmra.mxu0 %v1072
  %v1173 = vpop.f32.mrf.mxu0
  %v1174 = vadd.f32 %v1051, %v1173
  %v1175 = vpop.f32.mrf.mxu0
  %1176 = vmatprep.mubr.f32.mxu0 0.0
  %1177 = vmatmul.mubr.f32.gmra.mxu0 %v1075
  %v1178 = vpop.f32.mrf.mxu0
  %v1179 = vadd.f32 %v1051, %v1178
  %v1180 = vpop.f32.mrf.mxu0
  %1181 = vdwg.mxu0
  %1182 = vst [vmem:[#allocation2] sm:$0xff] %v1144
  %1183 = vst [vmem:[#allocation2 + $0x8] sm:$0xff] %v1149
  %1184 = vst [vmem:[#allocation2 + $0x10] sm:$0xff] %v1154
  %1185 = vst [vmem:[#allocation2 + $0x18] sm:$0xff] %v1159
  %1186 = vst [vmem:[#allocation2 + $0x20] sm:$0xff] %v1164
  %1187 = vst [vmem:[#allocation2 + $0x28] sm:$0xff] %v1169
  %1188 = vst [vmem:[#allocation2 + $0x30] sm:$0xff] %v1174
  %1189 = vst [vmem:[#allocation2 + $0x38] sm:$0xff] %v1179
  %v1190 = vld [vmem:[%s5] sm:$0xff]
  %v1191 = vld [vmem:[%s5 + $0x8] sm:$0xff]
  %v1192 = vld [vmem:[%s5 + $0x10] sm:$0xff]
  %v1193 = vld [vmem:[%s5 + $0x18] sm:$0xff]
  %v1194 = vld [vmem:[#allocation2] sm:$0xff]
  %1195 = vmatprep.subr.mxu0 0.0
  %1196 = vmatpush1.msra.mxu0 0.0
  %1197 = vmatprep.subr.mxu0 0.0
  %1198 = vmatpush1.msra.mxu0 0.0
  %1199 = vmatprep.subr.mxu0 0.0
  %1200 = vmatpush1.msra.mxu0 0.0
  %1201 = vmatprep.subr.mxu0 0.0
  %1202 = vmatpush1.msra.mxu0 0.0
  %1203 = vmatprep.subr.mxu0 0.0
  %1204 = vmatpush1.msra.mxu0 0.0
  %1205 = vmatprep.subr.mxu0 0.0
  %1206 = vmatpush1.msra.mxu0 0.0
  %1207 = vmatprep.subr.mxu0 0.0
  %1208 = vmatpush1.msra.mxu0 0.0
  %1209 = vmatprep.subr.mxu0 0.0
  %1210 = vmatpush1.msra.mxu0 0.0
  %1211 = vmatprep.subr.mxu0 0.0
  %1212 = vmatpush1.msra.mxu0 0.0
  %1213 = vmatprep.subr.mxu0 0.0
  %1214 = vmatpush1.msra.mxu0 0.0
  %1215 = vmatprep.subr.mxu0 0.0
  %1216 = vmatpush1.msra.mxu0 0.0
  %1217 = vmatprep.subr.mxu0 0.0
  %1218 = vmatpush1.msra.mxu0 0.0
  %1219 = vmatprep.subr.mxu0 0.0
  %1220 = vmatpush1.msra.mxu0 %v1193
  %1221 = vmatprep.subr.mxu0 0.0
  %1222 = vmatpush1.msra.mxu0 %v1192
  %1223 = vmatprep.subr.mxu0 0.0
  %1224 = vmatpush1.msra.mxu0 %v1191
  %1225 = vmatprep.subr.mxu0 0.0
  %1226 = vmatpush1.msra.mxu0 %v1190
  %1227 = vmatprep.subr.mxu0 0.0
  %1228 = vmatpush2.msra.mxu0 0.0
  %1229 = vmatprep.subr.mxu0 0.0
  %1230 = vmatpush2.msra.mxu0 0.0
  %1231 = vmatprep.subr.mxu0 0.0
  %1232 = vmatpush2.msra.mxu0 0.0
  %1233 = vmatprep.subr.mxu0 0.0
  %1234 = vmatpush2.msra.mxu0 0.0
  %1235 = vmatprep.subr.mxu0 0.0
  %1236 = vmatpush2.msra.mxu0 0.0
  %1237 = vmatprep.subr.mxu0 0.0
  %1238 = vmatpush2.msra.mxu0 0.0
  %1239 = vmatprep.subr.mxu0 0.0
  %1240 = vmatpush2.msra.mxu0 0.0
  %1241 = vmatprep.subr.mxu0 0.0
  %1242 = vmatpush2.msra.mxu0 0.0
  %1243 = vmatprep.subr.mxu0 0.0
  %1244 = vmatpush2.msra.mxu0 0.0
  %1245 = vmatprep.subr.mxu0 0.0
  %1246 = vmatpush2.msra.mxu0 0.0
  %1247 = vmatprep.subr.mxu0 0.0
  %1248 = vmatpush2.msra.mxu0 0.0
  %1249 = vmatprep.subr.mxu0 0.0
  %1250 = vmatpush2.msra.mxu0 0.0
  %1251 = vmatprep.subr.mxu0 0.0
  %1252 = vmatpush2.msra.mxu0 0.0
  %1253 = vmatprep.subr.mxu0 0.0
  %1254 = vmatpush2.msra.mxu0 0.0
  %1255 = vmatprep.subr.mxu0 0.0
  %1256 = vmatpush2.msra.mxu0 0.0
  %1257 = vmatprep.subr.mxu0 0.0
  %1258 = vmatpush2.msra.mxu0 0.0
  %1259 = vmatprep.mubr.f32.mxu0 0.0
  %1260 = vmatmul.mubr.f32.gmra.mxu0 %v197
  %v1261 = vpop.f32.mrf.mxu0
  %v1262 = vadd.f32 0.0, %v1261
  %v1263 = vpop.f32.mrf.mxu0
  %1264 = vdwg.mxu0
  %v1265 = vadd.f32 %v1194, %v1262
  %v1266 = vxor.u32 %v1265, 2147483648
  %v1267 = vmul.f32 %v1266, 1.442695
  %v1268 = vpow.pop %v1267
  %v1269 = vadd.f32 %v1268, 1.0
  %v1270 = vrcp.pop %v1269
  %v1271 = vmul.f32 1.0, %v1270
  %v1272 = vtanh.pop %v1265
  %v1273 = vmul.f32 %v1271, 0.0
  %1275 = vrot.lane.b32.xlu0 %v1272, 64
  %v1276 = vpop.permute.xlu0 %1275
  %v1278 = vmul.f32 %v1271, %v1276
  %1280 = vrot.lane.b32.xlu0 %v1278, 32
  %v1281 = vpop.permute.xlu0 %1280
  %v1283 = vadd.f32 %v1273, %v1281
  %v1284 = vtanh.pop %v1283
  %1286 = vrot.lane.b32.xlu0 %v1284, 64
  %v1287 = vpop.permute.xlu0 %1286
  %v1289 = vmul.f32 %v1271, %v1287
  %1291 = vrot.lane.b32.xlu0 %v1289, 32
  %v1292 = vpop.permute.xlu0 %1291
  %1294 = vst.msk [vmem:[#allocation3] sm:$0xff] %vm195, %v1292
  %v1295 = vld [vmem:[%s299] sm:$0xff]
  %v1296 = vsel %vm195, %v1292, 0
  %1298 = vmatprep.subr.mxu0 0.0
  %1299 = vmatpush1.msra.mxu0 0.0
  %1300 = vmatprep.subr.mxu0 0.0
  %1301 = vmatpush1.msra.mxu0 0.0
  %1302 = vmatprep.subr.mxu0 0.0
  %1303 = vmatpush1.msra.mxu0 0.0
  %1304 = vmatprep.subr.mxu0 0.0
  %1305 = vmatpush1.msra.mxu0 0.0
  %1306 = vmatprep.subr.mxu0 0.0
  %1307 = vmatpush1.msra.mxu0 0.0
  %1308 = vmatprep.subr.mxu0 0.0
  %1309 = vmatpush1.msra.mxu0 0.0
  %1310 = vmatprep.subr.mxu0 0.0
  %1311 = vmatpush1.msra.mxu0 0.0
  %1312 = vmatprep.subr.mxu0 0.0
  %1313 = vmatpush1.msra.mxu0 0.0
  %1314 = vmatprep.subr.mxu0 0.0
  %1315 = vmatpush1.msra.mxu0 0.0
  %1316 = vmatprep.subr.mxu0 0.0
  %1317 = vmatpush1.msra.mxu0 0.0
  %1318 = vmatprep.subr.mxu0 0.0
  %1319 = vmatpush1.msra.mxu0 0.0
  %1320 = vmatprep.subr.mxu0 0.0
  %1321 = vmatpush1.msra.mxu0 0.0
  %1322 = vmatprep.subr.mxu0 0.0
  %1323 = vmatpush1.msra.mxu0 %v1193
  %1324 = vmatprep.subr.mxu0 0.0
  %1325 = vmatpush1.msra.mxu0 %v1192
  %1326 = vmatprep.subr.mxu0 0.0
  %1327 = vmatpush1.msra.mxu0 %v1191
  %1328 = vmatprep.subr.mxu0 0.0
  %1329 = vmatpush1.msra.mxu0 %v1190
  %1330 = vmatprep.subr.mxu0 0.0
  %1331 = vmatpush2.msra.mxu0 0.0
  %1332 = vmatprep.subr.mxu0 0.0
  %1333 = vmatpush2.msra.mxu0 0.0
  %1334 = vmatprep.subr.mxu0 0.0
  %1335 = vmatpush2.msra.mxu0 0.0
  %1336 = vmatprep.subr.mxu0 0.0
  %1337 = vmatpush2.msra.mxu0 0.0
  %1338 = vmatprep.subr.mxu0 0.0
  %1339 = vmatpush2.msra.mxu0 0.0
  %1340 = vmatprep.subr.mxu0 0.0
  %1341 = vmatpush2.msra.mxu0 0.0
  %1342 = vmatprep.subr.mxu0 0.0
  %1343 = vmatpush2.msra.mxu0 0.0
  %1344 = vmatprep.subr.mxu0 0.0
  %1345 = vmatpush2.msra.mxu0 0.0
  %1346 = vmatprep.subr.mxu0 0.0
  %1347 = vmatpush2.msra.mxu0 0.0
  %1348 = vmatprep.subr.mxu0 0.0
  %1349 = vmatpush2.msra.mxu0 0.0
  %1350 = vmatprep.subr.mxu0 0.0
  %1351 = vmatpush2.msra.mxu0 0.0
  %1352 = vmatprep.subr.mxu0 0.0
  %1353 = vmatpush2.msra.mxu0 0.0
  %1354 = vmatprep.subr.mxu0 0.0
  %1355 = vmatpush2.msra.mxu0 0.0
  %1356 = vmatprep.subr.mxu0 0.0
  %1357 = vmatpush2.msra.mxu0 0.0
  %1358 = vmatprep.subr.mxu0 0.0
  %1359 = vmatpush2.msra.mxu0 0.0
  %1360 = vmatprep.subr.mxu0 0.0
  %1361 = vmatpush2.msra.mxu0 0.0
  %1362 = vmatprep.mubr.f32.mxu0 0.0
  %1363 = vmatmul.mubr.f32.gmra.mxu0 %v1296
  %v1364 = vpop.f32.mrf.mxu0
  %v1365 = vadd.f32 0.0, %v1364
  %v1366 = vpop.f32.mrf.mxu0
  %1367 = vdwg.mxu0
  %v1368 = vadd.f32 %v1295, %v1365
  %v1369 = vxor.u32 %v1368, 2147483648
  %v1370 = vmul.f32 %v1369, 1.442695
  %v1371 = vpow.pop %v1370
  %v1372 = vadd.f32 %v1371, 1.0
  %v1373 = vrcp.pop %v1372
  %v1374 = vmul.f32 1.0, %v1373
  %v1375 = vtanh.pop %v1368
  %v1376 = vmul.f32 %v1374, %v1283
  %1378 = vrot.lane.b32.xlu0 %v1375, 64
  %v1379 = vpop.permute.xlu0 %1378
  %v1381 = vmul.f32 %v1374, %v1379
  %1383 = vrot.lane.b32.xlu0 %v1381, 32
  %v1384 = vpop.permute.xlu0 %1383
  %v1386 = vadd.f32 %v1376, %v1384
  %v1387 = vtanh.pop %v1386
  %1389 = vrot.lane.b32.xlu0 %v1387, 64
  %v1390 = vpop.permute.xlu0 %1389
  %v1392 = vmul.f32 %v1374, %v1390
  %1394 = vrot.lane.b32.xlu0 %v1392, 32
  %v1395 = vpop.permute.xlu0 %1394
  %1397 = vst.msk [vmem:[%s402] sm:$0xff] %vm195, %v1395
  %v1398 = vld [vmem:[%s404] sm:$0xff]
  %v1399 = vsel %vm195, %v1395, 0
  %1401 = vmatprep.subr.mxu0 0.0
  %1402 = vmatpush1.msra.mxu0 0.0
  %1403 = vmatprep.subr.mxu0 0.0
  %1404 = vmatpush1.msra.mxu0 0.0
  %1405 = vmatprep.subr.mxu0 0.0
  %1406 = vmatpush1.msra.mxu0 0.0
  %1407 = vmatprep.subr.mxu0 0.0
  %1408 = vmatpush1.msra.mxu0 0.0
  %1409 = vmatprep.subr.mxu0 0.0
  %1410 = vmatpush1.msra.mxu0 0.0
  %1411 = vmatprep.subr.mxu0 0.0
  %1412 = vmatpush1.msra.mxu0 0.0
  %1413 = vmatprep.subr.mxu0 0.0
  %1414 = vmatpush1.msra.mxu0 0.0
  %1415 = vmatprep.subr.mxu0 0.0
  %1416 = vmatpush1.msra.mxu0 0.0
  %1417 = vmatprep.subr.mxu0 0.0
  %1418 = vmatpush1.msra.mxu0 0.0
  %1419 = vmatprep.subr.mxu0 0.0
  %1420 = vmatpush1.msra.mxu0 0.0
  %1421 = vmatprep.subr.mxu0 0.0
  %1422 = vmatpush1.msra.mxu0 0.0
  %1423 = vmatprep.subr.mxu0 0.0
  %1424 = vmatpush1.msra.mxu0 0.0
  %1425 = vmatprep.subr.mxu0 0.0
  %1426 = vmatpush1.msra.mxu0 %v1193
  %1427 = vmatprep.subr.mxu0 0.0
  %1428 = vmatpush1.msra.mxu0 %v1192
  %1429 = vmatprep.subr.mxu0 0.0
  %1430 = vmatpush1.msra.mxu0 %v1191
  %1431 = vmatprep.subr.mxu0 0.0
  %1432 = vmatpush1.msra.mxu0 %v1190
  %1433 = vmatprep.subr.mxu0 0.0
  %1434 = vmatpush2.msra.mxu0 0.0
  %1435 = vmatprep.subr.mxu0 0.0
  %1436 = vmatpush2.msra.mxu0 0.0
  %1437 = vmatprep.subr.mxu0 0.0
  %1438 = vmatpush2.msra.mxu0 0.0
  %1439 = vmatprep.subr.mxu0 0.0
  %1440 = vmatpush2.msra.mxu0 0.0
  %1441 = vmatprep.subr.mxu0 0.0
  %1442 = vmatpush2.msra.mxu0 0.0
  %1443 = vmatprep.subr.mxu0 0.0
  %1444 = vmatpush2.msra.mxu0 0.0
  %1445 = vmatprep.subr.mxu0 0.0
  %1446 = vmatpush2.msra.mxu0 0.0
  %1447 = vmatprep.subr.mxu0 0.0
  %1448 = vmatpush2.msra.mxu0 0.0
  %1449 = vmatprep.subr.mxu0 0.0
  %1450 = vmatpush2.msra.mxu0 0.0
  %1451 = vmatprep.subr.mxu0 0.0
  %1452 = vmatpush2.msra.mxu0 0.0
  %1453 = vmatprep.subr.mxu0 0.0
  %1454 = vmatpush2.msra.mxu0 0.0
  %1455 = vmatprep.subr.mxu0 0.0
  %1456 = vmatpush2.msra.mxu0 0.0
  %1457 = vmatprep.subr.mxu0 0.0
  %1458 = vmatpush2.msra.mxu0 0.0
  %1459 = vmatprep.subr.mxu0 0.0
  %1460 = vmatpush2.msra.mxu0 0.0
  %1461 = vmatprep.subr.mxu0 0.0
  %1462 = vmatpush2.msra.mxu0 0.0
  %1463 = vmatprep.subr.mxu0 0.0
  %1464 = vmatpush2.msra.mxu0 0.0
  %1465 = vmatprep.mubr.f32.mxu0 0.0
  %1466 = vmatmul.mubr.f32.gmra.mxu0 %v1399
  %v1467 = vpop.f32.mrf.mxu0
  %v1468 = vadd.f32 0.0, %v1467
  %v1469 = vpop.f32.mrf.mxu0
  %1470 = vdwg.mxu0
  %v1471 = vadd.f32 %v1398, %v1468
  %v1472 = vxor.u32 %v1471, 2147483648
  %v1473 = vmul.f32 %v1472, 1.442695
  %v1474 = vpow.pop %v1473
  %v1475 = vadd.f32 %v1474, 1.0
  %v1476 = vrcp.pop %v1475
  %v1477 = vmul.f32 1.0, %v1476
  %v1478 = vtanh.pop %v1471
  %v1479 = vmul.f32 %v1477, %v1386
  %1481 = vrot.lane.b32.xlu0 %v1478, 64
  %v1482 = vpop.permute.xlu0 %1481
  %v1484 = vmul.f32 %v1477, %v1482
  %1486 = vrot.lane.b32.xlu0 %v1484, 32
  %v1487 = vpop.permute.xlu0 %1486
  %v1489 = vadd.f32 %v1479, %v1487
  %v1490 = vtanh.pop %v1489
  %1492 = vrot.lane.b32.xlu0 %v1490, 64
  %v1493 = vpop.permute.xlu0 %1492
  %v1495 = vmul.f32 %v1477, %v1493
  %1497 = vrot.lane.b32.xlu0 %v1495, 32
  %v1498 = vpop.permute.xlu0 %1497
  %1500 = vst.msk [vmem:[%s507] sm:$0xff] %vm195, %v1498
  %v1501 = vld [vmem:[%s509] sm:$0xff]
  %v1502 = vsel %vm195, %v1498, 0
  %1504 = vmatprep.subr.mxu0 0.0
  %1505 = vmatpush1.msra.mxu0 0.0
  %1506 = vmatprep.subr.mxu0 0.0
  %1507 = vmatpush1.msra.mxu0 0.0
  %1508 = vmatprep.subr.mxu0 0.0
  %1509 = vmatpush1.msra.mxu0 0.0
  %1510 = vmatprep.subr.mxu0 0.0
  %1511 = vmatpush1.msra.mxu0 0.0
  %1512 = vmatprep.subr.mxu0 0.0
  %1513 = vmatpush1.msra.mxu0 0.0
  %1514 = vmatprep.subr.mxu0 0.0
  %1515 = vmatpush1.msra.mxu0 0.0
  %1516 = vmatprep.subr.mxu0 0.0
  %1517 = vmatpush1.msra.mxu0 0.0
  %1518 = vmatprep.subr.mxu0 0.0
  %1519 = vmatpush1.msra.mxu0 0.0
  %1520 = vmatprep.subr.mxu0 0.0
  %1521 = vmatpush1.msra.mxu0 0.0
  %1522 = vmatprep.subr.mxu0 0.0
  %1523 = vmatpush1.msra.mxu0 0.0
  %1524 = vmatprep.subr.mxu0 0.0
  %1525 = vmatpush1.msra.mxu0 0.0
  %1526 = vmatprep.subr.mxu0 0.0
  %1527 = vmatpush1.msra.mxu0 0.0
  %1528 = vmatprep.subr.mxu0 0.0
  %1529 = vmatpush1.msra.mxu0 %v1193
  %1530 = vmatprep.subr.mxu0 0.0
  %1531 = vmatpush1.msra.mxu0 %v1192
  %1532 = vmatprep.subr.mxu0 0.0
  %1533 = vmatpush1.msra.mxu0 %v1191
  %1534 = vmatprep.subr.mxu0 0.0
  %1535 = vmatpush1.msra.mxu0 %v1190
  %1536 = vmatprep.subr.mxu0 0.0
  %1537 = vmatpush2.msra.mxu0 0.0
  %1538 = vmatprep.subr.mxu0 0.0
  %1539 = vmatpush2.msra.mxu0 0.0
  %1540 = vmatprep.subr.mxu0 0.0
  %1541 = vmatpush2.msra.mxu0 0.0
  %1542 = vmatprep.subr.mxu0 0.0
  %1543 = vmatpush2.msra.mxu0 0.0
  %1544 = vmatprep.subr.mxu0 0.0
  %1545 = vmatpush2.msra.mxu0 0.0
  %1546 = vmatprep.subr.mxu0 0.0
  %1547 = vmatpush2.msra.mxu0 0.0
  %1548 = vmatprep.subr.mxu0 0.0
  %1549 = vmatpush2.msra.mxu0 0.0
  %1550 = vmatprep.subr.mxu0 0.0
  %1551 = vmatpush2.msra.mxu0 0.0
  %1552 = vmatprep.subr.mxu0 0.0
  %1553 = vmatpush2.msra.mxu0 0.0
  %1554 = vmatprep.subr.mxu0 0.0
  %1555 = vmatpush2.msra.mxu0 0.0
  %1556 = vmatprep.subr.mxu0 0.0
  %1557 = vmatpush2.msra.mxu0 0.0
  %1558 = vmatprep.subr.mxu0 0.0
  %1559 = vmatpush2.msra.mxu0 0.0
  %1560 = vmatprep.subr.mxu0 0.0
  %1561 = vmatpush2.msra.mxu0 0.0
  %1562 = vmatprep.subr.mxu0 0.0
  %1563 = vmatpush2.msra.mxu0 0.0
  %1564 = vmatprep.subr.mxu0 0.0
  %1565 = vmatpush2.msra.mxu0 0.0
  %1566 = vmatprep.subr.mxu0 0.0
  %1567 = vmatpush2.msra.mxu0 0.0
  %1568 = vmatprep.mubr.f32.mxu0 0.0
  %1569 = vmatmul.mubr.f32.gmra.mxu0 %v1502
  %v1570 = vpop.f32.mrf.mxu0
  %v1571 = vadd.f32 0.0, %v1570
  %v1572 = vpop.f32.mrf.mxu0
  %1573 = vdwg.mxu0
  %v1574 = vadd.f32 %v1501, %v1571
  %v1575 = vxor.u32 %v1574, 2147483648
  %v1576 = vmul.f32 %v1575, 1.442695
  %v1577 = vpow.pop %v1576
  %v1578 = vadd.f32 %v1577, 1.0
  %v1579 = vrcp.pop %v1578
  %v1580 = vmul.f32 1.0, %v1579
  %v1581 = vtanh.pop %v1574
  %v1582 = vmul.f32 %v1580, %v1489
  %1584 = vrot.lane.b32.xlu0 %v1581, 64
  %v1585 = vpop.permute.xlu0 %1584
  %v1587 = vmul.f32 %v1580, %v1585
  %1589 = vrot.lane.b32.xlu0 %v1587, 32
  %v1590 = vpop.permute.xlu0 %1589
  %v1592 = vadd.f32 %v1582, %v1590
  %v1593 = vtanh.pop %v1592
  %1595 = vrot.lane.b32.xlu0 %v1593, 64
  %v1596 = vpop.permute.xlu0 %1595
  %v1598 = vmul.f32 %v1580, %v1596
  %1600 = vrot.lane.b32.xlu0 %v1598, 32
  %v1601 = vpop.permute.xlu0 %1600
  %1603 = vst.msk [vmem:[%s612] sm:$0xff] %vm195, %v1601
  %v1604 = vld [vmem:[%s614] sm:$0xff]
  %v1605 = vsel %vm195, %v1601, 0
  %1607 = vmatprep.subr.mxu0 0.0
  %1608 = vmatpush1.msra.mxu0 0.0
  %1609 = vmatprep.subr.mxu0 0.0
  %1610 = vmatpush1.msra.mxu0 0.0
  %1611 = vmatprep.subr.mxu0 0.0
  %1612 = vmatpush1.msra.mxu0 0.0
  %1613 = vmatprep.subr.mxu0 0.0
  %1614 = vmatpush1.msra.mxu0 0.0
  %1615 = vmatprep.subr.mxu0 0.0
  %1616 = vmatpush1.msra.mxu0 0.0
  %1617 = vmatprep.subr.mxu0 0.0
  %1618 = vmatpush1.msra.mxu0 0.0
  %1619 = vmatprep.subr.mxu0 0.0
  %1620 = vmatpush1.msra.mxu0 0.0
  %1621 = vmatprep.subr.mxu0 0.0
  %1622 = vmatpush1.msra.mxu0 0.0
  %1623 = vmatprep.subr.mxu0 0.0
  %1624 = vmatpush1.msra.mxu0 0.0
  %1625 = vmatprep.subr.mxu0 0.0
  %1626 = vmatpush1.msra.mxu0 0.0
  %1627 = vmatprep.subr.mxu0 0.0
  %1628 = vmatpush1.msra.mxu0 0.0
  %1629 = vmatprep.subr.mxu0 0.0
  %1630 = vmatpush1.msra.mxu0 0.0
  %1631 = vmatprep.subr.mxu0 0.0
  %1632 = vmatpush1.msra.mxu0 %v1193
  %1633 = vmatprep.subr.mxu0 0.0
  %1634 = vmatpush1.msra.mxu0 %v1192
  %1635 = vmatprep.subr.mxu0 0.0
  %1636 = vmatpush1.msra.mxu0 %v1191
  %1637 = vmatprep.subr.mxu0 0.0
  %1638 = vmatpush1.msra.mxu0 %v1190
  %1639 = vmatprep.subr.mxu0 0.0
  %1640 = vmatpush2.msra.mxu0 0.0
  %1641 = vmatprep.subr.mxu0 0.0
  %1642 = vmatpush2.msra.mxu0 0.0
  %1643 = vmatprep.subr.mxu0 0.0
  %1644 = vmatpush2.msra.mxu0 0.0
  %1645 = vmatprep.subr.mxu0 0.0
  %1646 = vmatpush2.msra.mxu0 0.0
  %1647 = vmatprep.subr.mxu0 0.0
  %1648 = vmatpush2.msra.mxu0 0.0
  %1649 = vmatprep.subr.mxu0 0.0
  %1650 = vmatpush2.msra.mxu0 0.0
  %1651 = vmatprep.subr.mxu0 0.0
  %1652 = vmatpush2.msra.mxu0 0.0
  %1653 = vmatprep.subr.mxu0 0.0
  %1654 = vmatpush2.msra.mxu0 0.0
  %1655 = vmatprep.subr.mxu0 0.0
  %1656 = vmatpush2.msra.mxu0 0.0
  %1657 = vmatprep.subr.mxu0 0.0
  %1658 = vmatpush2.msra.mxu0 0.0
  %1659 = vmatprep.subr.mxu0 0.0
  %1660 = vmatpush2.msra.mxu0 0.0
  %1661 = vmatprep.subr.mxu0 0.0
  %1662 = vmatpush2.msra.mxu0 0.0
  %1663 = vmatprep.subr.mxu0 0.0
  %1664 = vmatpush2.msra.mxu0 0.0
  %1665 = vmatprep.subr.mxu0 0.0
  %1666 = vmatpush2.msra.mxu0 0.0
  %1667 = vmatprep.subr.mxu0 0.0
  %1668 = vmatpush2.msra.mxu0 0.0
  %1669 = vmatprep.subr.mxu0 0.0
  %1670 = vmatpush2.msra.mxu0 0.0
  %1671 = vmatprep.mubr.f32.mxu0 0.0
  %1672 = vmatmul.mubr.f32.gmra.mxu0 %v1605
  %v1673 = vpop.f32.mrf.mxu0
  %v1674 = vadd.f32 0.0, %v1673
  %v1675 = vpop.f32.mrf.mxu0
  %1676 = vdwg.mxu0
  %v1677 = vadd.f32 %v1604, %v1674
  %v1678 = vxor.u32 %v1677, 2147483648
  %v1679 = vmul.f32 %v1678, 1.442695
  %v1680 = vpow.pop %v1679
  %v1681 = vadd.f32 %v1680, 1.0
  %v1682 = vrcp.pop %v1681
  %v1683 = vmul.f32 1.0, %v1682
  %v1684 = vtanh.pop %v1677
  %v1685 = vmul.f32 %v1683, %v1592
  %1687 = vrot.lane.b32.xlu0 %v1684, 64
  %v1688 = vpop.permute.xlu0 %1687
  %v1690 = vmul.f32 %v1683, %v1688
  %1692 = vrot.lane.b32.xlu0 %v1690, 32
  %v1693 = vpop.permute.xlu0 %1692
  %v1695 = vadd.f32 %v1685, %v1693
  %v1696 = vtanh.pop %v1695
  %1698 = vrot.lane.b32.xlu0 %v1696, 64
  %v1699 = vpop.permute.xlu0 %1698
  %v1701 = vmul.f32 %v1683, %v1699
  %1703 = vrot.lane.b32.xlu0 %v1701, 32
  %v1704 = vpop.permute.xlu0 %1703
  %1706 = vst.msk [vmem:[%s717] sm:$0xff] %vm195, %v1704
  %v1707 = vld [vmem:[%s719] sm:$0xff]
  %v1708 = vsel %vm195, %v1704, 0
  %1710 = vmatprep.subr.mxu0 0.0
  %1711 = vmatpush1.msra.mxu0 0.0
  %1712 = vmatprep.subr.mxu0 0.0
  %1713 = vmatpush1.msra.mxu0 0.0
  %1714 = vmatprep.subr.mxu0 0.0
  %1715 = vmatpush1.msra.mxu0 0.0
  %1716 = vmatprep.subr.mxu0 0.0
  %1717 = vmatpush1.msra.mxu0 0.0
  %1718 = vmatprep.subr.mxu0 0.0
  %1719 = vmatpush1.msra.mxu0 0.0
  %1720 = vmatprep.subr.mxu0 0.0
  %1721 = vmatpush1.msra.mxu0 0.0
  %1722 = vmatprep.subr.mxu0 0.0
  %1723 = vmatpush1.msra.mxu0 0.0
  %1724 = vmatprep.subr.mxu0 0.0
  %1725 = vmatpush1.msra.mxu0 0.0
  %1726 = vmatprep.subr.mxu0 0.0
  %1727 = vmatpush1.msra.mxu0 0.0
  %1728 = vmatprep.subr.mxu0 0.0
  %1729 = vmatpush1.msra.mxu0 0.0
  %1730 = vmatprep.subr.mxu0 0.0
  %1731 = vmatpush1.msra.mxu0 0.0
  %1732 = vmatprep.subr.mxu0 0.0
  %1733 = vmatpush1.msra.mxu0 0.0
  %1734 = vmatprep.subr.mxu0 0.0
  %1735 = vmatpush1.msra.mxu0 %v1193
  %1736 = vmatprep.subr.mxu0 0.0
  %1737 = vmatpush1.msra.mxu0 %v1192
  %1738 = vmatprep.subr.mxu0 0.0
  %1739 = vmatpush1.msra.mxu0 %v1191
  %1740 = vmatprep.subr.mxu0 0.0
  %1741 = vmatpush1.msra.mxu0 %v1190
  %1742 = vmatprep.subr.mxu0 0.0
  %1743 = vmatpush2.msra.mxu0 0.0
  %1744 = vmatprep.subr.mxu0 0.0
  %1745 = vmatpush2.msra.mxu0 0.0
  %1746 = vmatprep.subr.mxu0 0.0
  %1747 = vmatpush2.msra.mxu0 0.0
  %1748 = vmatprep.subr.mxu0 0.0
  %1749 = vmatpush2.msra.mxu0 0.0
  %1750 = vmatprep.subr.mxu0 0.0
  %1751 = vmatpush2.msra.mxu0 0.0
  %1752 = vmatprep.subr.mxu0 0.0
  %1753 = vmatpush2.msra.mxu0 0.0
  %1754 = vmatprep.subr.mxu0 0.0
  %1755 = vmatpush2.msra.mxu0 0.0
  %1756 = vmatprep.subr.mxu0 0.0
  %1757 = vmatpush2.msra.mxu0 0.0
  %1758 = vmatprep.subr.mxu0 0.0
  %1759 = vmatpush2.msra.mxu0 0.0
  %1760 = vmatprep.subr.mxu0 0.0
  %1761 = vmatpush2.msra.mxu0 0.0
  %1762 = vmatprep.subr.mxu0 0.0
  %1763 = vmatpush2.msra.mxu0 0.0
  %1764 = vmatprep.subr.mxu0 0.0
  %1765 = vmatpush2.msra.mxu0 0.0
  %1766 = vmatprep.subr.mxu0 0.0
  %1767 = vmatpush2.msra.mxu0 0.0
  %1768 = vmatprep.subr.mxu0 0.0
  %1769 = vmatpush2.msra.mxu0 0.0
  %1770 = vmatprep.subr.mxu0 0.0
  %1771 = vmatpush2.msra.mxu0 0.0
  %1772 = vmatprep.subr.mxu0 0.0
  %1773 = vmatpush2.msra.mxu0 0.0
  %1774 = vmatprep.mubr.f32.mxu0 0.0
  %1775 = vmatmul.mubr.f32.gmra.mxu0 %v1708
  %v1776 = vpop.f32.mrf.mxu0
  %v1777 = vadd.f32 0.0, %v1776
  %v1778 = vpop.f32.mrf.mxu0
  %1779 = vdwg.mxu0
  %v1780 = vadd.f32 %v1707, %v1777
  %v1781 = vxor.u32 %v1780, 2147483648
  %v1782 = vmul.f32 %v1781, 1.442695
  %v1783 = vpow.pop %v1782
  %v1784 = vadd.f32 %v1783, 1.0
  %v1785 = vrcp.pop %v1784
  %v1786 = vmul.f32 1.0, %v1785
  %v1787 = vtanh.pop %v1780
  %v1788 = vmul.f32 %v1786, %v1695
  %1790 = vrot.lane.b32.xlu0 %v1787, 64
  %v1791 = vpop.permute.xlu0 %1790
  %v1793 = vmul.f32 %v1786, %v1791
  %1795 = vrot.lane.b32.xlu0 %v1793, 32
  %v1796 = vpop.permute.xlu0 %1795
  %v1798 = vadd.f32 %v1788, %v1796
  %v1799 = vtanh.pop %v1798
  %1801 = vrot.lane.b32.xlu0 %v1799, 64
  %v1802 = vpop.permute.xlu0 %1801
  %v1804 = vmul.f32 %v1786, %v1802
  %1806 = vrot.lane.b32.xlu0 %v1804, 32
  %v1807 = vpop.permute.xlu0 %1806
  %1809 = vst.msk [vmem:[%s822] sm:$0xff] %vm195, %v1807
  %v1810 = vld [vmem:[%s824] sm:$0xff]
  %v1811 = vsel %vm195, %v1807, 0
  %1813 = vmatprep.subr.mxu0 0.0
  %1814 = vmatpush1.msra.mxu0 0.0
  %1815 = vmatprep.subr.mxu0 0.0
  %1816 = vmatpush1.msra.mxu0 0.0
  %1817 = vmatprep.subr.mxu0 0.0
  %1818 = vmatpush1.msra.mxu0 0.0
  %1819 = vmatprep.subr.mxu0 0.0
  %1820 = vmatpush1.msra.mxu0 0.0
  %1821 = vmatprep.subr.mxu0 0.0
  %1822 = vmatpush1.msra.mxu0 0.0
  %1823 = vmatprep.subr.mxu0 0.0
  %1824 = vmatpush1.msra.mxu0 0.0
  %1825 = vmatprep.subr.mxu0 0.0
  %1826 = vmatpush1.msra.mxu0 0.0
  %1827 = vmatprep.subr.mxu0 0.0
  %1828 = vmatpush1.msra.mxu0 0.0
  %1829 = vmatprep.subr.mxu0 0.0
  %1830 = vmatpush1.msra.mxu0 0.0
  %1831 = vmatprep.subr.mxu0 0.0
  %1832 = vmatpush1.msra.mxu0 0.0
  %1833 = vmatprep.subr.mxu0 0.0
  %1834 = vmatpush1.msra.mxu0 0.0
  %1835 = vmatprep.subr.mxu0 0.0
  %1836 = vmatpush1.msra.mxu0 0.0
  %1837 = vmatprep.subr.mxu0 0.0
  %1838 = vmatpush1.msra.mxu0 %v1193
  %1839 = vmatprep.subr.mxu0 0.0
  %1840 = vmatpush1.msra.mxu0 %v1192
  %1841 = vmatprep.subr.mxu0 0.0
  %1842 = vmatpush1.msra.mxu0 %v1191
  %1843 = vmatprep.subr.mxu0 0.0
  %1844 = vmatpush1.msra.mxu0 %v1190
  %1845 = vmatprep.subr.mxu0 0.0
  %1846 = vmatpush2.msra.mxu0 0.0
  %1847 = vmatprep.subr.mxu0 0.0
  %1848 = vmatpush2.msra.mxu0 0.0
  %1849 = vmatprep.subr.mxu0 0.0
  %1850 = vmatpush2.msra.mxu0 0.0
  %1851 = vmatprep.subr.mxu0 0.0
  %1852 = vmatpush2.msra.mxu0 0.0
  %1853 = vmatprep.subr.mxu0 0.0
  %1854 = vmatpush2.msra.mxu0 0.0
  %1855 = vmatprep.subr.mxu0 0.0
  %1856 = vmatpush2.msra.mxu0 0.0
  %1857 = vmatprep.subr.mxu0 0.0
  %1858 = vmatpush2.msra.mxu0 0.0
  %1859 = vmatprep.subr.mxu0 0.0
  %1860 = vmatpush2.msra.mxu0 0.0
  %1861 = vmatprep.subr.mxu0 0.0
  %1862 = vmatpush2.msra.mxu0 0.0
  %1863 = vmatprep.subr.mxu0 0.0
  %1864 = vmatpush2.msra.mxu0 0.0
  %1865 = vmatprep.subr.mxu0 0.0
  %1866 = vmatpush2.msra.mxu0 0.0
  %1867 = vmatprep.subr.mxu0 0.0
  %1868 = vmatpush2.msra.mxu0 0.0
  %1869 = vmatprep.subr.mxu0 0.0
  %1870 = vmatpush2.msra.mxu0 0.0
  %1871 = vmatprep.subr.mxu0 0.0
  %1872 = vmatpush2.msra.mxu0 0.0
  %1873 = vmatprep.subr.mxu0 0.0
  %1874 = vmatpush2.msra.mxu0 0.0
  %1875 = vmatprep.subr.mxu0 0.0
  %1876 = vmatpush2.msra.mxu0 0.0
  %1877 = vmatprep.mubr.f32.mxu0 0.0
  %1878 = vmatmul.mubr.f32.gmra.mxu0 %v1811
  %v1879 = vpop.f32.mrf.mxu0
  %v1880 = vadd.f32 0.0, %v1879
  %v1881 = vpop.f32.mrf.mxu0
  %1882 = vdwg.mxu0
  %v1883 = vadd.f32 %v1810, %v1880
  %v1884 = vxor.u32 %v1883, 2147483648
  %v1885 = vmul.f32 %v1884, 1.442695
  %v1886 = vpow.pop %v1885
  %v1887 = vadd.f32 %v1886, 1.0
  %v1888 = vrcp.pop %v1887
  %v1889 = vmul.f32 1.0, %v1888
  %v1890 = vtanh.pop %v1883
  %v1891 = vmul.f32 %v1889, %v1798
  %1893 = vrot.lane.b32.xlu0 %v1890, 64
  %v1894 = vpop.permute.xlu0 %1893
  %v1896 = vmul.f32 %v1889, %v1894
  %1898 = vrot.lane.b32.xlu0 %v1896, 32
  %v1899 = vpop.permute.xlu0 %1898
  %v1901 = vadd.f32 %v1891, %v1899
  %v1902 = vtanh.pop %v1901
  %1904 = vrot.lane.b32.xlu0 %v1902, 64
  %v1905 = vpop.permute.xlu0 %1904
  %v1907 = vmul.f32 %v1889, %v1905
  %1909 = vrot.lane.b32.xlu0 %v1907, 32
  %v1910 = vpop.permute.xlu0 %1909
  %1912 = vst.msk [vmem:[%s927] sm:$0xff] %vm195, %v1910
  %v1913 = vld [vmem:[%s929] sm:$0xff]
  %v1914 = vsel %vm195, %v1910, 0
  %1916 = vmatprep.subr.mxu0 0.0
  %1917 = vmatpush1.msra.mxu0 0.0
  %1918 = vmatprep.subr.mxu0 0.0
  %1919 = vmatpush1.msra.mxu0 0.0
  %1920 = vmatprep.subr.mxu0 0.0
  %1921 = vmatpush1.msra.mxu0 0.0
  %1922 = vmatprep.subr.mxu0 0.0
  %1923 = vmatpush1.msra.mxu0 0.0
  %1924 = vmatprep.subr.mxu0 0.0
  %1925 = vmatpush1.msra.mxu0 0.0
  %1926 = vmatprep.subr.mxu0 0.0
  %1927 = vmatpush1.msra.mxu0 0.0
  %1928 = vmatprep.subr.mxu0 0.0
  %1929 = vmatpush1.msra.mxu0 0.0
  %1930 = vmatprep.subr.mxu0 0.0
  %1931 = vmatpush1.msra.mxu0 0.0
  %1932 = vmatprep.subr.mxu0 0.0
  %1933 = vmatpush1.msra.mxu0 0.0
  %1934 = vmatprep.subr.mxu0 0.0
  %1935 = vmatpush1.msra.mxu0 0.0
  %1936 = vmatprep.subr.mxu0 0.0
  %1937 = vmatpush1.msra.mxu0 0.0
  %1938 = vmatprep.subr.mxu0 0.0
  %1939 = vmatpush1.msra.mxu0 0.0
  %1940 = vmatprep.subr.mxu0 0.0
  %1941 = vmatpush1.msra.mxu0 %v1193
  %1942 = vmatprep.subr.mxu0 0.0
  %1943 = vmatpush1.msra.mxu0 %v1192
  %1944 = vmatprep.subr.mxu0 0.0
  %1945 = vmatpush1.msra.mxu0 %v1191
  %1946 = vmatprep.subr.mxu0 0.0
  %1947 = vmatpush1.msra.mxu0 %v1190
  %1948 = vmatprep.subr.mxu0 0.0
  %1949 = vmatpush2.msra.mxu0 0.0
  %1950 = vmatprep.subr.mxu0 0.0
  %1951 = vmatpush2.msra.mxu0 0.0
  %1952 = vmatprep.subr.mxu0 0.0
  %1953 = vmatpush2.msra.mxu0 0.0
  %1954 = vmatprep.subr.mxu0 0.0
  %1955 = vmatpush2.msra.mxu0 0.0
  %1956 = vmatprep.subr.mxu0 0.0
  %1957 = vmatpush2.msra.mxu0 0.0
  %1958 = vmatprep.subr.mxu0 0.0
  %1959 = vmatpush2.msra.mxu0 0.0
  %1960 = vmatprep.subr.mxu0 0.0
  %1961 = vmatpush2.msra.mxu0 0.0
  %1962 = vmatprep.subr.mxu0 0.0
  %1963 = vmatpush2.msra.mxu0 0.0
  %1964 = vmatprep.subr.mxu0 0.0
  %1965 = vmatpush2.msra.mxu0 0.0
  %1966 = vmatprep.subr.mxu0 0.0
  %1967 = vmatpush2.msra.mxu0 0.0
  %1968 = vmatprep.subr.mxu0 0.0
  %1969 = vmatpush2.msra.mxu0 0.0
  %1970 = vmatprep.subr.mxu0 0.0
  %1971 = vmatpush2.msra.mxu0 0.0
  %1972 = vmatprep.subr.mxu0 0.0
  %1973 = vmatpush2.msra.mxu0 0.0
  %1974 = vmatprep.subr.mxu0 0.0
  %1975 = vmatpush2.msra.mxu0 0.0
  %1976 = vmatprep.subr.mxu0 0.0
  %1977 = vmatpush2.msra.mxu0 0.0
  %1978 = vmatprep.subr.mxu0 0.0
  %1979 = vmatpush2.msra.mxu0 0.0
  %1980 = vmatprep.mubr.f32.mxu0 0.0
  %1981 = vmatmul.mubr.f32.gmra.mxu0 %v1914
  %v1982 = vpop.f32.mrf.mxu0
  %v1983 = vadd.f32 0.0, %v1982
  %v1984 = vpop.f32.mrf.mxu0
  %1985 = vdwg.mxu0
  %v1986 = vadd.f32 %v1913, %v1983
  %v1987 = vxor.u32 %v1986, 2147483648
  %v1988 = vmul.f32 %v1987, 1.442695
  %v1989 = vpow.pop %v1988
  %v1990 = vadd.f32 %v1989, 1.0
  %v1991 = vrcp.pop %v1990
  %v1992 = vmul.f32 1.0, %v1991
  %v1993 = vtanh.pop %v1986
  %v1994 = vmul.f32 %v1992, %v1901
  %1996 = vrot.lane.b32.xlu0 %v1993, 64
  %v1997 = vpop.permute.xlu0 %1996
  %v1999 = vmul.f32 %v1992, %v1997
  %2001 = vrot.lane.b32.xlu0 %v1999, 32
  %v2002 = vpop.permute.xlu0 %2001
  %v2004 = vadd.f32 %v1994, %v2002
  %v2005 = vtanh.pop %v2004
  %2007 = vrot.lane.b32.xlu0 %v2005, 64
  %v2008 = vpop.permute.xlu0 %2007
  %v2010 = vmul.f32 %v1992, %v2008
  %2012 = vrot.lane.b32.xlu0 %v2010, 32
  %v2013 = vpop.permute.xlu0 %2012
  %2015 = vst.msk [vmem:[%s1032] sm:$0xff] %vm195, %v2013
  %v2016 = vld [vmem:[#allocation3] sm:$0xff]
  %v2017 = vld [vmem:[#allocation3 + $0x8] sm:$0xff]
  %v2018 = vld [vmem:[#allocation3 + $0x10] sm:$0xff]
  %v2019 = vld [vmem:[#allocation3 + $0x18] sm:$0xff]
  %v2020 = vld [vmem:[#allocation3 + $0x20] sm:$0xff]
  %v2021 = vld [vmem:[#allocation3 + $0x28] sm:$0xff]
  %v2022 = vld [vmem:[#allocation3 + $0x30] sm:$0xff]
  %v2023 = vld [vmem:[#allocation3 + $0x38] sm:$0xff]
  %v2024 = vmax.f32 %v2016, 0.0
  %v2025 = vmax.f32 %v2017, 0.0
  %v2026 = vmax.f32 %v2018, 0.0
  %v2027 = vmax.f32 %v2019, 0.0
  %v2028 = vmax.f32 %v2020, 0.0
  %v2029 = vmax.f32 %v2021, 0.0
  %v2030 = vmax.f32 %v2022, 0.0
  %v2031 = vmax.f32 %v2023, 0.0
  %v2032 = vld [vmem:[%s7] sm:$0xff]
  %v2033 = vld [vmem:[%s7 + $0x8] sm:$0xff]
  %v2034 = vld [vmem:[%s7 + $0x10] sm:$0xff]
  %v2035 = vld [vmem:[%s7 + $0x18] sm:$0xff]
  %v2036 = vld [vmem:[%s8] sm:$0x1]
  %v2038 = vlaneseq
  %v2039 = vshrl.u32 %v2038, 7
  %v2040 = vsub.s32 0, %v2039
  %v2041 = vrot.slane %v2036, %v2040
  %v2044 = vsel %vm195, %v2024, 0
  %v2047 = vsel %vm195, %v2025, 0
  %v2050 = vsel %vm195, %v2026, 0
  %v2053 = vsel %vm195, %v2027, 0
  %v2056 = vsel %vm195, %v2028, 0
  %v2059 = vsel %vm195, %v2029, 0
  %v2062 = vsel %vm195, %v2030, 0
  %v2065 = vsel %vm195, %v2031, 0
  %2067 = vmatprep.subr.mxu0 0.0
  %2068 = vmatpush1.msra.mxu0 0.0
  %2069 = vmatprep.subr.mxu0 0.0
  %2070 = vmatpush1.msra.mxu0 0.0
  %2071 = vmatprep.subr.mxu0 0.0
  %2072 = vmatpush1.msra.mxu0 0.0
  %2073 = vmatprep.subr.mxu0 0.0
  %2074 = vmatpush1.msra.mxu0 0.0
  %2075 = vmatprep.subr.mxu0 0.0
  %2076 = vmatpush1.msra.mxu0 0.0
  %2077 = vmatprep.subr.mxu0 0.0
  %2078 = vmatpush1.msra.mxu0 0.0
  %2079 = vmatprep.subr.mxu0 0.0
  %2080 = vmatpush1.msra.mxu0 0.0
  %2081 = vmatprep.subr.mxu0 0.0
  %2082 = vmatpush1.msra.mxu0 0.0
  %2083 = vmatprep.subr.mxu0 0.0
  %2084 = vmatpush1.msra.mxu0 0.0
  %2085 = vmatprep.subr.mxu0 0.0
  %2086 = vmatpush1.msra.mxu0 0.0
  %2087 = vmatprep.subr.mxu0 0.0
  %2088 = vmatpush1.msra.mxu0 0.0
  %2089 = vmatprep.subr.mxu0 0.0
  %2090 = vmatpush1.msra.mxu0 0.0
  %2091 = vmatprep.subr.mxu0 0.0
  %2092 = vmatpush1.msra.mxu0 %v2035
  %2093 = vmatprep.subr.mxu0 0.0
  %2094 = vmatpush1.msra.mxu0 %v2034
  %2095 = vmatprep.subr.mxu0 0.0
  %2096 = vmatpush1.msra.mxu0 %v2033
  %2097 = vmatprep.subr.mxu0 0.0
  %2098 = vmatpush1.msra.mxu0 %v2032
  %2099 = vmatprep.subr.mxu0 0.0
  %2100 = vmatpush2.msra.mxu0 0.0
  %2101 = vmatprep.subr.mxu0 0.0
  %2102 = vmatpush2.msra.mxu0 0.0
  %2103 = vmatprep.subr.mxu0 0.0
  %2104 = vmatpush2.msra.mxu0 0.0
  %2105 = vmatprep.subr.mxu0 0.0
  %2106 = vmatpush2.msra.mxu0 0.0
  %2107 = vmatprep.subr.mxu0 0.0
  %2108 = vmatpush2.msra.mxu0 0.0
  %2109 = vmatprep.subr.mxu0 0.0
  %2110 = vmatpush2.msra.mxu0 0.0
  %2111 = vmatprep.subr.mxu0 0.0
  %2112 = vmatpush2.msra.mxu0 0.0
  %2113 = vmatprep.subr.mxu0 0.0
  %2114 = vmatpush2.msra.mxu0 0.0
  %2115 = vmatprep.subr.mxu0 0.0
  %2116 = vmatpush2.msra.mxu0 0.0
  %2117 = vmatprep.subr.mxu0 0.0
  %2118 = vmatpush2.msra.mxu0 0.0
  %2119 = vmatprep.subr.mxu0 0.0
  %2120 = vmatpush2.msra.mxu0 0.0
  %2121 = vmatprep.subr.mxu0 0.0
  %2122 = vmatpush2.msra.mxu0 0.0
  %2123 = vmatprep.subr.mxu0 0.0
  %2124 = vmatpush2.msra.mxu0 0.0
  %2125 = vmatprep.subr.mxu0 0.0
  %2126 = vmatpush2.msra.mxu0 0.0
  %2127 = vmatprep.subr.mxu0 0.0
  %2128 = vmatpush2.msra.mxu0 0.0
  %2129 = vmatprep.subr.mxu0 0.0
  %2130 = vmatpush2.msra.mxu0 0.0
  %2131 = vmatprep.mubr.f32.mxu0 0.0
  %2132 = vmatmul.mubr.f32.gmra.mxu0 %v2044
  %v2133 = vpop.f32.mrf.mxu0
  %v2134 = vadd.f32 %v2041, %v2133
  %v2135 = vpop.f32.mrf.mxu0
  %2136 = vmatprep.mubr.f32.mxu0 0.0
  %2137 = vmatmul.mubr.f32.gmra.mxu0 %v2047
  %v2138 = vpop.f32.mrf.mxu0
  %v2139 = vadd.f32 %v2041, %v2138
  %v2140 = vpop.f32.mrf.mxu0
  %2141 = vmatprep.mubr.f32.mxu0 0.0
  %2142 = vmatmul.mubr.f32.gmra.mxu0 %v2050
  %v2143 = vpop.f32.mrf.mxu0
  %v2144 = vadd.f32 %v2041, %v2143
  %v2145 = vpop.f32.mrf.mxu0
  %2146 = vmatprep.mubr.f32.mxu0 0.0
  %2147 = vmatmul.mubr.f32.gmra.mxu0 %v2053
  %v2148 = vpop.f32.mrf.mxu0
  %v2149 = vadd.f32 %v2041, %v2148
  %v2150 = vpop.f32.mrf.mxu0
  %2151 = vmatprep.mubr.f32.mxu0 0.0
  %2152 = vmatmul.mubr.f32.gmra.mxu0 %v2056
  %v2153 = vpop.f32.mrf.mxu0
  %v2154 = vadd.f32 %v2041, %v2153
  %v2155 = vpop.f32.mrf.mxu0
  %2156 = vmatprep.mubr.f32.mxu0 0.0
  %2157 = vmatmul.mubr.f32.gmra.mxu0 %v2059
  %v2158 = vpop.f32.mrf.mxu0
  %v2159 = vadd.f32 %v2041, %v2158
  %v2160 = vpop.f32.mrf.mxu0
  %2161 = vmatprep.mubr.f32.mxu0 0.0
  %2162 = vmatmul.mubr.f32.gmra.mxu0 %v2062
  %v2163 = vpop.f32.mrf.mxu0
  %v2164 = vadd.f32 %v2041, %v2163
  %v2165 = vpop.f32.mrf.mxu0
  %2166 = vmatprep.mubr.f32.mxu0 0.0
  %2167 = vmatmul.mubr.f32.gmra.mxu0 %v2065
  %v2168 = vpop.f32.mrf.mxu0
  %v2169 = vadd.f32 %v2041, %v2168
  %v2170 = vpop.f32.mrf.mxu0
  %2171 = vdwg.mxu0
  %2172 = vst [vmem:[%s9] sm:$0xff] %v2134
  %2173 = vst [vmem:[%s9 + $0x8] sm:$0xff] %v2139
  %2174 = vst [vmem:[%s9 + $0x10] sm:$0xff] %v2144
  %2175 = vst [vmem:[%s9 + $0x18] sm:$0xff] %v2149
  %2176 = vst [vmem:[%s9 + $0x20] sm:$0xff] %v2154
  %2177 = vst [vmem:[%s9 + $0x28] sm:$0xff] %v2159
  %2178 = vst [vmem:[%s9 + $0x30] sm:$0xff] %v2164
  %2179 = vst [vmem:[%s9 + $0x38] sm:$0xff] %v2169
  // Predicated region
  $region38: #{lstm_forward.1} parent=0 // pred_check
    _
  $region39: #{lstm_forward.1} parent=0 // pred_check_branch
    %2181 = sbr.rel (0) target = $region41
  $region40: #{lstm_forward.1} parent=0 // pred_region
    _
  $region41: #{lstm_forward.1} parent=0 // pred_fallthru
    _
  // Predicated region
  $region42: #{lstm_forward.1} parent=0 // pred_check
    _
  $region43: #{lstm_forward.1} parent=0 // pred_check_branch
    %2183 = sbr.rel (0) target = $region45
  $region44: #{lstm_forward.1} parent=0 // pred_region
    _
  $region45: #{lstm_forward.1} parent=0 // pred_fallthru
    _

</llo_original>
